<compile_context>
chip_gen: v5e
topology: v5e:2x2
jax: 0.10.0
libtpu: 0.0.40
codegen_flags: <defaults>
</compile_context>

<pallas_src>
import functools

import jax
import jax.numpy as jnp
from jax.experimental import pallas as pl
from jax.experimental.pallas import tpu as pltpu


def _vq_kernel(z_ref, e_ref, et_ref, esqh_ref, zq_ref, sse_ref, *,
               hw_valid, tile_hw, needs_mask):
    """One (batch, spatial) tile in NCHW layout.

    z_ref   : (1, D, T)   tile of activations (D = e_dim, T = tile_hw)
    e_ref   : (n_e, D)    codebook (VMEM-resident, constant index_map)
    et_ref  : (D, n_e)    codebook transposed (for the one-hot lookup)
    esqh_ref: (n_e, 1)    0.5 * per-codeword squared norms
    zq_ref  : (1, D, T)   quantized output tile (NCHW layout, lane-dense T)
    sse_ref : (1, 1)      running sum of (z_q - z)^2 over the whole grid
    """
    z = z_ref[0].astype(jnp.float32)                                   # (D, T)

    # score_n = 0.5*||E_n||^2 - E_n . z   (same argmin as the full distance)
    ez = jnp.dot(e_ref[...].astype(jnp.float32), z,
                 preferred_element_type=jnp.float32)                   # (n_e, T)
    score = esqh_ref[...] - ez                                         # (n_e, T)

    # First-occurrence argmin along the codebook (sublane) axis, tie-safe.
    n_e = score.shape[0]
    iota = jax.lax.broadcasted_iota(jnp.int32, score.shape, 0)         # (n_e, T)
    s_min = jnp.min(score, axis=0, keepdims=True)                      # (1, T)
    idx = jnp.min(jnp.where(score == s_min, iota, n_e),
                  axis=0, keepdims=True)                               # (1, T)

    # Codebook lookup as a one-hot matmul (MXU), result already in NCHW layout.
    one_hot = (iota == idx).astype(jnp.float32)                        # (n_e, T)
    zq = jnp.dot(et_ref[...].astype(jnp.float32), one_hot,
                 preferred_element_type=jnp.float32)                   # (D, T)
    zq_ref[0] = zq.astype(zq_ref.dtype)

    # Accumulate sum((z_q - z)^2), masking any padded spatial columns.
    diff = zq - z
    if needs_mask:
        col = (pl.program_id(1) * tile_hw
               + jax.lax.broadcasted_iota(jnp.int32, (1, tile_hw), 1))
        diff = jnp.where(col < hw_valid, diff, 0.0)

    @pl.when(jnp.logical_and(pl.program_id(0) == 0, pl.program_id(1) == 0))
    def _():
        sse_ref[...] = jnp.zeros_like(sse_ref)

    sse_ref[...] += jnp.sum(diff * diff, keepdims=True)


def _pick_hw_tile(hw, n_e):
    """Pick a lane-dense spatial tile and the (possibly padded) HW extent.

    The cap keeps the ~6 f32 (n_e, tile) intermediates within ~8 MiB so the
    kernel fits comfortably in scoped VMEM on every generation (v7x: 64 MiB
    physical / 32 MiB default scoped; v5e default scoped is only 16 MiB).
    """
    cap = max(128, min(2048, ((8 * 1024 * 1024) // (24 * n_e)) // 128 * 128))
    if hw < 128:
        return hw, hw                      # single full-width block, no padding
    for t in (2048, 1024, 512, 256, 128):
        if t <= cap and hw % t == 0:
            return t, hw                   # divides exactly, no padding
    hw_pad = ((hw + 127) // 128) * 128     # pad to a lane-dense multiple
    for t in (1024, 512, 256, 128):
        if t <= cap and hw_pad % t == 0:
            return t, hw_pad
    return 128, hw_pad


def vector_quantizer_forward(z_nchw, embedding, beta):
    """Forward pass of VectorQuantizer. Returns (loss, z_q_1) like the module."""
    B, C, H, W = z_nchw.shape
    n_e, e_dim = embedding.shape
    assert C == e_dim, "channel dim must equal e_dim"

    HW = H * W
    z3 = z_nchw.reshape(B, C, HW)                       # free reshape, stays NCHW

    tile_hw, hw_pad = _pick_hw_tile(HW, n_e)
    if hw_pad != HW:
        z3 = jnp.pad(z3, ((0, 0), (0, 0), (0, hw_pad - HW)))
    num_hw_tiles = hw_pad // tile_hw

    e = embedding.astype(jnp.float32)
    e_t = e.T                                           # (D, n_e)
    esq_half = (0.5 * jnp.sum(e * e, axis=1))[:, None]  # (n_e, 1)

    kernel = functools.partial(_vq_kernel, hw_valid=HW, tile_hw=tile_hw,
                               needs_mask=(hw_pad != HW))

    zq3, sse = pl.pallas_call(
        kernel,
        out_shape=(
            jax.ShapeDtypeStruct((B, e_dim, hw_pad), z_nchw.dtype),
            jax.ShapeDtypeStruct((1, 1), jnp.float32),
        ),
        grid_spec=pltpu.PrefetchScalarGridSpec(
            num_scalar_prefetch=0,
            grid=(B, num_hw_tiles),
            in_specs=[
                pl.BlockSpec((1, e_dim, tile_hw), lambda b, t: (b, 0, t)),  # z
                pl.BlockSpec((n_e, e_dim), lambda b, t: (0, 0)),   # E (resident)
                pl.BlockSpec((e_dim, n_e), lambda b, t: (0, 0)),   # E^T (resident)
                pl.BlockSpec((n_e, 1), lambda b, t: (0, 0)),       # 0.5*||E||^2
            ],
            out_specs=(
                pl.BlockSpec((1, e_dim, tile_hw), lambda b, t: (b, 0, t)),  # z_q
                pl.BlockSpec((1, 1), lambda b, t: (0, 0)),         # SSE accumulator
            ),
        ),
        compiler_params=pltpu.CompilerParams(
            dimension_semantics=("arbitrary", "arbitrary"),  # shared SSE accumulator
            vmem_limit_bytes=32 * 1024 * 1024),
    )(z3, e, e_t, esq_half)

    z_q = zq3[:, :, :HW].reshape(B, C, H, W)            # free reshape back to NCHW

    # codebook_loss + beta * commitment_loss; both equal mean((z_q - z)^2) in value.
    mse = sse[0, 0] / jnp.float32(z_nchw.size)
    loss = (1.0 + beta) * mse
    # TODO(synk): straight-through estimator / .detach() are gradient-only
    # semantics; the forward value of z + (z_q - z).detach() is exactly z_q.
    return loss, z_q


def vector_quantizer_reference(z, embedding, beta):
    """Pure-JAX reference matching the PyTorch forward exactly (values)."""
    B, C, H, W = z.shape
    z_perm = jnp.transpose(z, (0, 2, 3, 1))
    z_flat = z_perm.reshape(-1, C)
    d = (jnp.sum(z_flat ** 2, axis=1, keepdims=True)
         + jnp.sum(embedding ** 2, axis=1)
         - 2.0 * z_flat @ embedding.T)
    idx = jnp.argmin(d, axis=1)
    z_q = embedding[idx].reshape(z_perm.shape)
    z_q = jnp.transpose(z_q, (0, 3, 1, 2))
    codebook_loss = jnp.mean((z_q - z) ** 2)
    commitment_loss = jnp.mean((z_q - z) ** 2)
    loss = codebook_loss + beta * commitment_loss
    return loss, z_q   # forward value of z + (z_q - z).detach() is z_q


if __name__ == "__main__":
    # VectorQuantizer(n_e=256, num_bits=8, e_dim=64, beta=0.25, ...); input NCHW.
    n_e, e_dim, beta = 256, 64, 0.25
    B, H, W = 2, 16, 16

    key = jax.random.PRNGKey(0)
    kz, ke = jax.random.split(key)
    z = jax.random.normal(kz, (B, e_dim, H, W), jnp.float32)
    embedding = jax.random.uniform(ke, (n_e, e_dim), jnp.float32,
                                   minval=-1.2, maxval=1.2)

    fwd = jax.jit(functools.partial(vector_quantizer_forward, beta=beta))
    loss, z_q = jax.block_until_ready(fwd(z, embedding))

    ref_loss, ref_zq = jax.block_until_ready(
        vector_quantizer_reference(z, embedding, beta))

    assert z_q.shape == z.shape
    assert jnp.allclose(z_q, ref_zq, rtol=1e-4, atol=1e-4), "z_q mismatch vs reference"
    assert jnp.allclose(loss, ref_loss, rtol=1e-4, atol=1e-4), "loss mismatch vs reference"

    print("KERNEL_OK")
</pallas_src>

<mosaic_0001>
module attributes {stable_mosaic.version = 11 : i64} {
  func.func @_vq_kernel(%arg0: i32, %arg1: i32, %arg2: memref<1x64x256xf32, #tpu.memory_space<vmem>>, %arg3: memref<256x64xf32, #tpu.memory_space<vmem>>, %arg4: memref<64x256xf32, #tpu.memory_space<vmem>>, %arg5: memref<256x1xf32, #tpu.memory_space<vmem>>, %arg6: memref<1x64x256xf32, #tpu.memory_space<vmem>>, %arg7: memref<1x1xf32, #tpu.memory_space<vmem>>) attributes {dimension_semantics = [#tpu.dimension_semantics<arbitrary>, #tpu.dimension_semantics<arbitrary>], iteration_bounds = array<i64: 2, 1>, scalar_prefetch = 0 : i64, scratch_operands = 0 : i64, tpu.core_type = #tpu.core_type<tc>, window_params = [{transform_indices = @transform_0, window_bounds = array<i64: 1, 64, 256>}, {pipeline_mode = #tpu.pipeline_mode<synchronous>, transform_indices = @transform_1, window_bounds = array<i64: 256, 64>}, {pipeline_mode = #tpu.pipeline_mode<synchronous>, transform_indices = @transform_2, window_bounds = array<i64: 64, 256>}, {pipeline_mode = #tpu.pipeline_mode<synchronous>, transform_indices = @transform_3, window_bounds = array<i64: 256, 1>}, {transform_indices = @transform_4, window_bounds = array<i64: 1, 64, 256>}, {pipeline_mode = #tpu.pipeline_mode<synchronous>, transform_indices = @transform_5, window_bounds = array<i64: 1, 1>}]} {
    %c0 = arith.constant 0 : index
    %c0_0 = arith.constant 0 : index
    %c0_1 = arith.constant 0 : index
    %0 = vector.load %arg2[%c0, %c0_0, %c0_1] : memref<1x64x256xf32, #tpu.memory_space<vmem>>, vector<1x64x256xf32>
    %1 = vector.shape_cast %0 : vector<1x64x256xf32> to vector<64x256xf32>
    %c0_2 = arith.constant 0 : index
    %c0_3 = arith.constant 0 : index
    %2 = vector.load %arg3[%c0_2, %c0_3] : memref<256x64xf32, #tpu.memory_space<vmem>>, vector<256x64xf32>
    %cst = arith.constant dense<0.000000e+00> : vector<256x256xf32>
    %3 = tpu.matmul %2, %1, %cst {dimension_numbers = #tpu.dot_dimension_numbers<[1], [0], [0], [1], [0, 0, 1, 1], [], []>} : vector<256x64xf32>, vector<64x256xf32>, vector<256x256xf32> -> vector<256x256xf32>
    %c0_4 = arith.constant 0 : index
    %c0_5 = arith.constant 0 : index
    %4 = vector.load %arg5[%c0_4, %c0_5] : memref<256x1xf32, #tpu.memory_space<vmem>>, vector<256x1xf32>
    %5 = vector.broadcast %4 : vector<256x1xf32> to vector<256x256xf32>
    %6 = arith.subf %5, %3 : vector<256x256xf32>
    %7 = tpu.iota {dimensions = array<i32: 0>} : vector<256x256xi32>
    %cst_6 = arith.constant dense<0x7F800000> : vector<256xf32>
    %8 = vector.multi_reduction <minimumf>, %6, %cst_6 [0] : vector<256x256xf32> to vector<256xf32>
    %9 = vector.shape_cast %8 : vector<256xf32> to vector<1x256xf32>
    %10 = vector.broadcast %9 : vector<1x256xf32> to vector<256x256xf32>
    %11 = arith.cmpf oeq, %6, %10 : vector<256x256xf32>
    %c256_i32 = arith.constant 256 : i32
    %12 = vector.broadcast %c256_i32 : i32 to vector<256x256xi32>
    %13 = arith.select %11, %7, %12 : vector<256x256xi1>, vector<256x256xi32>
    %cst_7 = arith.constant dense<2147483647> : vector<256xi32>
    %14 = vector.multi_reduction <minsi>, %13, %cst_7 [0] : vector<256x256xi32> to vector<256xi32>
    %15 = vector.shape_cast %14 : vector<256xi32> to vector<1x256xi32>
    %16 = vector.broadcast %15 : vector<1x256xi32> to vector<256x256xi32>
    %17 = arith.cmpi eq, %7, %16 : vector<256x256xi32>
    %18 = arith.extui %17 : vector<256x256xi1> to vector<256x256xi32>
    %19 = arith.sitofp %18 : vector<256x256xi32> to vector<256x256xf32>
    %c0_8 = arith.constant 0 : index
    %c0_9 = arith.constant 0 : index
    %20 = vector.load %arg4[%c0_8, %c0_9] : memref<64x256xf32, #tpu.memory_space<vmem>>, vector<64x256xf32>
    %cst_10 = arith.constant dense<0.000000e+00> : vector<64x256xf32>
    %21 = tpu.matmul %20, %19, %cst_10 {dimension_numbers = #tpu.dot_dimension_numbers<[1], [0], [0], [1], [0, 0, 1, 1], [], []>} : vector<64x256xf32>, vector<256x256xf32>, vector<64x256xf32> -> vector<64x256xf32>
    %c0_11 = arith.constant 0 : index
    %c0_12 = arith.constant 0 : index
    %c0_13 = arith.constant 0 : index
    %22 = vector.load %arg6[%c0_11, %c0_12, %c0_13] : memref<1x64x256xf32, #tpu.memory_space<vmem>>, vector<1x64x256xf32>
    %23 = vector.shape_cast %22 : vector<1x64x256xf32> to vector<64x256xf32>
    %24 = vector.shape_cast %21 : vector<64x256xf32> to vector<1x64x256xf32>
    tpu.vector_store %arg6[%c0_11, %c0_12, %c0_13], %24 {strides = array<i32>} : memref<1x64x256xf32, #tpu.memory_space<vmem>>, vector<1x64x256xf32>,
    %25 = arith.subf %21, %1 : vector<64x256xf32>
    %c0_i32 = arith.constant 0 : i32
    %26 = arith.cmpi eq, %arg0, %c0_i32 : i32
    %c0_i32_14 = arith.constant 0 : i32
    %27 = arith.cmpi eq, %arg1, %c0_i32_14 : i32
    %28 = arith.andi %26, %27 : i1
    %29 = arith.extui %28 : i1 to i32
    %c0_i32_15 = arith.constant 0 : i32
    %30 = arith.cmpi ne, %29, %c0_i32_15 : i32
    scf.if %30 {
      %cst_21 = arith.constant 0.000000e+00 : f32
      %40 = vector.broadcast %cst_21 : f32 to vector<1x1xf32>
      %c0_22 = arith.constant 0 : index
      %c0_23 = arith.constant 0 : index
      %41 = vector.load %arg7[%c0_22, %c0_23] : memref<1x1xf32, #tpu.memory_space<vmem>>, vector<1x1xf32>
      tpu.vector_store %arg7[%c0_22, %c0_23], %40 {strides = array<i32>} : memref<1x1xf32, #tpu.memory_space<vmem>>, vector<1x1xf32>,
    } else {
    }
    %c0_16 = arith.constant 0 : index
    %c0_17 = arith.constant 0 : index
    %31 = vector.load %arg7[%c0_16, %c0_17] : memref<1x1xf32, #tpu.memory_space<vmem>>, vector<1x1xf32>
    %32 = arith.mulf %25, %25 : vector<64x256xf32>
    %33 = vector.shape_cast %32 : vector<64x256xf32> to vector<1x64x256xf32>
    %cst_18 = arith.constant dense<0.000000e+00> : vector<1xf32>
    %34 = vector.multi_reduction <add>, %33, %cst_18 [1, 2] : vector<1x64x256xf32> to vector<1xf32>
    %35 = vector.shape_cast %34 : vector<1xf32> to vector<1x1x1xf32>
    %36 = vector.extract %35[0, 0, 0] : f32 from vector<1x1x1xf32>
    %37 = vector.broadcast %36 : f32 to vector<1x1xf32>
    %38 = arith.addf %31, %37 : vector<1x1xf32>
    %c0_19 = arith.constant 0 : index
    %c0_20 = arith.constant 0 : index
    %39 = vector.load %arg7[%c0_19, %c0_20] : memref<1x1xf32, #tpu.memory_space<vmem>>, vector<1x1xf32>
    tpu.vector_store %arg7[%c0_19, %c0_20], %38 {strides = array<i32>} : memref<1x1xf32, #tpu.memory_space<vmem>>, vector<1x1xf32>,
    return
  }
  func.func @transform_0(%arg0: i32, %arg1: i32) -> (i32, i32, i32) {
    %c0_i32 = arith.constant 0 : i32
    %c0_i32_0 = arith.constant 0 : i32
    return %arg0, %c0_i32, %arg1 : i32, i32, i32
  }
  func.func @transform_1(%arg0: i32, %arg1: i32) -> (i32, i32) {
    %c0_i32 = arith.constant 0 : i32
    %c0_i32_0 = arith.constant 0 : i32
    %c0_i32_1 = arith.constant 0 : i32
    return %c0_i32, %c0_i32_0 : i32, i32
  }
  func.func @transform_2(%arg0: i32, %arg1: i32) -> (i32, i32) {
    %c0_i32 = arith.constant 0 : i32
    %c0_i32_0 = arith.constant 0 : i32
    %c0_i32_1 = arith.constant 0 : i32
    return %c0_i32, %c0_i32_0 : i32, i32
  }
  func.func @transform_3(%arg0: i32, %arg1: i32) -> (i32, i32) {
    %c0_i32 = arith.constant 0 : i32
    %c0_i32_0 = arith.constant 0 : i32
    %c0_i32_1 = arith.constant 0 : i32
    return %c0_i32, %c0_i32_0 : i32, i32
  }
  func.func @transform_4(%arg0: i32, %arg1: i32) -> (i32, i32, i32) {
    %c0_i32 = arith.constant 0 : i32
    %c0_i32_0 = arith.constant 0 : i32
    return %arg0, %c0_i32, %arg1 : i32, i32, i32
  }
  func.func @transform_5(%arg0: i32, %arg1: i32) -> (i32, i32) {
    %c0_i32 = arith.constant 0 : i32
    %c0_i32_0 = arith.constant 0 : i32
    %c0_i32_1 = arith.constant 0 : i32
    return %c0_i32, %c0_i32_0 : i32, i32
  }
}

</mosaic_0001>

<llo_original>
// kernel: vector_quantizer_forward.1
$region0: #{vector_quantizer_forward.1}
  #allocation0 [shape = 'u32[]', space=smem, size = 0x4, offset = 0x4, fixed_abs, tag = 'smem constant byte address 0x4 - core index']
  #allocation1 [shape = 'u32[72,128]{1,0:T(1,128)}', space=vmem, size = 0x9000, scoped, tag = 'internal scratch']
  %s0 = inlined_call_operand.vmem [shape: f32[2,64,256], index: 0, kind: input, shape index: {}]
  %s1 = inlined_call_operand.vmem [shape: f32[256,64], index: 1, kind: input, shape index: {}]
  %s2 = inlined_call_operand.vmem [shape: f32[64,256], index: 2, kind: input, shape index: {}]
  %s3 = inlined_call_operand.vmem [shape: f32[256,1], index: 3, kind: input, shape index: {}]
  %s4 = inlined_call_operand.vmem [shape: f32[2,64,256], index: 4, kind: output, shape index: {0}]
  %s5 = inlined_call_operand.hbm [shape: f32[1,1], index: 5, kind: output, shape index: {1}]
  %6 = xla_tuple %s4, %s5
  %s7 = sld [smem:[#allocation0]]
  $region61: #{vector_quantizer_forward.1} parent=0
    _
  %s9 = ssub.s32 1, %s7
  %s10 = scalar_select 0, %s9, %s7
  $region1: #{vector_quantizer_forward.1} parent=0
    #allocation2 [shape = 'u8[512]{0}', space=vmem, size = 0x400, scoped, tag = 'output window, operand 1, single buffered']
    #allocation3 [shape = 's32[2]{0}', space=sflag, size = 0x8, scoped, tag = 'scoped memory for vector_quantizer_forward.1']
    %11 = vsyncpa [#allocation3], 0
    loop: start=0, step=1, limit=4
    $region2: #{vector_quantizer_forward.1} parent=1 // loop_pre_header
      _
    $region3: #{vector_quantizer_forward.1} parent=1 // loop_header
      %s13 = sphi 0, %s17
      %p14 = scmp.ge.s32.totalorder %s13, 4
      %s20 = sphi 0, %s32
      %s21 = sphi 0, %s28
      %s22 = sphi 0, %s20
      %s23 = sphi 0, %s21
      %s24 = sphi 0, %s22
      %s25 = sphi 0, %s23
      %s37 = sphi 0, %s39
      %s40 = sphi 0, %s37
      %s41 = sphi 0, %s40
      %s57 = sphi 0, %s41
      %s61 = sphi 0, %s61
      %s63 = sphi 0, %s61
      %s64 = sphi 0, %s63
      %s78 = sphi 0, %s64
      %s82 = sphi 0, %s82
      %s84 = sphi 0, %s82
      %s85 = sphi 0, %s84
      %s99 = sphi 0, %s85
      %s103 = sphi 0, %s103
      %s105 = sphi 0, %s103
      %s106 = sphi 0, %s105
      %s120 = sphi 0, %s106
      %s128 = sphi 0, %s130
      %s131 = sphi 0, %s128
      %s132 = sphi 0, %s131
      %s148 = sphi 0, %s132
      %s152 = sphi 0, %s152
      %s154 = sphi 0, %s152
      %s155 = sphi 0, %s154
      %s169 = sphi 0, %s155
    $region4: #{vector_quantizer_forward.1} parent=1 // loop_header_branch
      %16 = sbr.rel (%p14) target = $region8
    $region5: #{vector_quantizer_forward.1} parent=1 // loop_body
      %s18 = ssub.s32 %s13, 1
      %s19 = ssub.s32 %s13, 2
      %s26 = sadd.s32 1, %s21
      %p27 = scmp.ge.s32.totalorder %s26, 1
      %s28 = scalar_select %p27, 0, %s26
      %s29 = sadd.s32 1, %s20
      %s30 = scalar_select %p27, %s29, %s20
      %p31 = scmp.ge.s32.totalorder %s30, 2
      %s32 = scalar_select %p31, 0, %s30
      %s33 = ssub.s32 %s20, %s32
      %s34 = ssub.s32 %s21, %s28
      %s35 = sor.u32 %s33, %s34
      %p36 = scmp.eq.s32.totalorder %s35, 0
      %s38 = sadd.s32 %s37, 1
      %s39 = scalar_select %p36, %s37, %s38
      %p42 = pneg %p36
      %p43 = scmp.eq.s32.totalorder %s13, 1
      %p44 = por %p42, %p43
      %p45 = scmp.ne.s32.totalorder %s37, %s40
      %p46 = scmp.eq.s32.totalorder %s13, 0
      %p47 = por %p45, %p46
      %p48 = scmp.ne.s32.totalorder %s37, %s40
      %p49 = scmp.eq.s32.totalorder %s18, 1
      %p50 = por %p48, %p49
      %p51 = scmp.ne.s32.totalorder %s40, %s41
      %p52 = scmp.eq.s32.totalorder %s18, 0
      %p53 = por %p51, %p52
      %p54 = scmp.ne.s32.totalorder %s40, %s41
      %p55 = scmp.eq.s32.totalorder %s19, 1
      %p56 = por %p54, %p55
      %p58 = scmp.ne.s32.totalorder %s41, %s57
      %p59 = scmp.eq.s32.totalorder %s19, 0
      %p60 = por %p58, %p59
      %s62 = sadd.s32 %s61, 1
      %p65 = scmp.eq.s32.totalorder %s13, 1
      %p66 = scmp.ne.s32.totalorder %s61, %s63
      %p67 = scmp.eq.s32.totalorder %s13, 0
      %p68 = por %p66, %p67
      %p69 = scmp.ne.s32.totalorder %s61, %s63
      %p70 = scmp.eq.s32.totalorder %s18, 1
      %p71 = por %p69, %p70
      %p72 = scmp.ne.s32.totalorder %s63, %s64
      %p73 = scmp.eq.s32.totalorder %s18, 0
      %p74 = por %p72, %p73
      %p75 = scmp.ne.s32.totalorder %s63, %s64
      %p76 = scmp.eq.s32.totalorder %s19, 1
      %p77 = por %p75, %p76
      %p79 = scmp.ne.s32.totalorder %s64, %s78
      %p80 = scmp.eq.s32.totalorder %s19, 0
      %p81 = por %p79, %p80
      %s83 = sadd.s32 %s82, 1
      %p86 = scmp.eq.s32.totalorder %s13, 1
      %p87 = scmp.ne.s32.totalorder %s82, %s84
      %p88 = scmp.eq.s32.totalorder %s13, 0
      %p89 = por %p87, %p88
      %p90 = scmp.ne.s32.totalorder %s82, %s84
      %p91 = scmp.eq.s32.totalorder %s18, 1
      %p92 = por %p90, %p91
      %p93 = scmp.ne.s32.totalorder %s84, %s85
      %p94 = scmp.eq.s32.totalorder %s18, 0
      %p95 = por %p93, %p94
      %p96 = scmp.ne.s32.totalorder %s84, %s85
      %p97 = scmp.eq.s32.totalorder %s19, 1
      %p98 = por %p96, %p97
      %p100 = scmp.ne.s32.totalorder %s85, %s99
      %p101 = scmp.eq.s32.totalorder %s19, 0
      %p102 = por %p100, %p101
      %s104 = sadd.s32 %s103, 1
      %p107 = scmp.eq.s32.totalorder %s13, 1
      %p108 = scmp.ne.s32.totalorder %s103, %s105
      %p109 = scmp.eq.s32.totalorder %s13, 0
      %p110 = por %p108, %p109
      %p111 = scmp.ne.s32.totalorder %s103, %s105
      %p112 = scmp.eq.s32.totalorder %s18, 1
      %p113 = por %p111, %p112
      %p114 = scmp.ne.s32.totalorder %s105, %s106
      %p115 = scmp.eq.s32.totalorder %s18, 0
      %p116 = por %p114, %p115
      %p117 = scmp.ne.s32.totalorder %s105, %s106
      %p118 = scmp.eq.s32.totalorder %s19, 1
      %p119 = por %p117, %p118
      %p121 = scmp.ne.s32.totalorder %s106, %s120
      %p122 = scmp.eq.s32.totalorder %s19, 0
      %p123 = por %p121, %p122
      %s124 = ssub.s32 %s20, %s32
      %s125 = ssub.s32 %s21, %s28
      %s126 = sor.u32 %s124, %s125
      %p127 = scmp.eq.s32.totalorder %s126, 0
      %s129 = sadd.s32 %s128, 1
      %s130 = scalar_select %p127, %s128, %s129
      %p133 = pneg %p127
      %p134 = scmp.eq.s32.totalorder %s13, 1
      %p135 = por %p133, %p134
      %p136 = scmp.ne.s32.totalorder %s128, %s131
      %p137 = scmp.eq.s32.totalorder %s13, 0
      %p138 = por %p136, %p137
      %p139 = scmp.ne.s32.totalorder %s128, %s131
      %p140 = scmp.eq.s32.totalorder %s18, 1
      %p141 = por %p139, %p140
      %p142 = scmp.ne.s32.totalorder %s131, %s132
      %p143 = scmp.eq.s32.totalorder %s18, 0
      %p144 = por %p142, %p143
      %p145 = scmp.ne.s32.totalorder %s131, %s132
      %p146 = scmp.eq.s32.totalorder %s19, 1
      %p147 = por %p145, %p146
      %p149 = scmp.ne.s32.totalorder %s132, %s148
      %p150 = scmp.eq.s32.totalorder %s19, 0
      %p151 = por %p149, %p150
      %s153 = sadd.s32 %s152, 1
      %p156 = scmp.eq.s32.totalorder %s13, 1
      %p157 = scmp.ne.s32.totalorder %s152, %s154
      %p158 = scmp.eq.s32.totalorder %s13, 0
      %p159 = por %p157, %p158
      %p160 = scmp.ne.s32.totalorder %s152, %s154
      %p161 = scmp.eq.s32.totalorder %s18, 1
      %p162 = por %p160, %p161
      %p163 = scmp.ne.s32.totalorder %s154, %s155
      %p164 = scmp.eq.s32.totalorder %s18, 0
      %p165 = por %p163, %p164
      %p166 = scmp.ne.s32.totalorder %s154, %s155
      %p167 = scmp.eq.s32.totalorder %s19, 1
      %p168 = por %p166, %p167
      %p170 = scmp.ne.s32.totalorder %s155, %s169
      %p171 = scmp.eq.s32.totalorder %s19, 0
      %p172 = por %p170, %p171
      %p173 = scmp.le.s32.totalorder 1, %s13
      %p174 = scmp.lt.s32.totalorder %s13, 3
      %p175 = pnand %p173, %p174
      %p176 = pneg %p175
      // Predicated region
      $region9: #{vector_quantizer_forward.1} parent=5 // pred_check
        _
      $region10: #{vector_quantizer_forward.1} parent=5 // pred_check_branch
        %178 = sbr.rel (%p175) target = $region12
      $region11: #{vector_quantizer_forward.1} parent=5 // pred_region
        %s179 = ssub.s32 %s13, 1
        // Predicated region
        $region13: #{vector_quantizer_forward.1} parent=11 // pred_check
          %p180 = pneg %p74
        $region14: #{vector_quantizer_forward.1} parent=11 // pred_check_branch
          %182 = sbr.rel (%p180) target = $region16
        $region15: #{vector_quantizer_forward.1} parent=11 // pred_region
          _
        $region16: #{vector_quantizer_forward.1} parent=11 // pred_fallthru
          _
        // Predicated region
        $region17: #{vector_quantizer_forward.1} parent=11 // pred_check
          %p183 = pneg %p95
        $region18: #{vector_quantizer_forward.1} parent=11 // pred_check_branch
          %185 = sbr.rel (%p183) target = $region20
        $region19: #{vector_quantizer_forward.1} parent=11 // pred_region
          _
        $region20: #{vector_quantizer_forward.1} parent=11 // pred_fallthru
          _
        // Predicated region
        $region21: #{vector_quantizer_forward.1} parent=11 // pred_check
          %p186 = pneg %p116
        $region22: #{vector_quantizer_forward.1} parent=11 // pred_check_branch
          %188 = sbr.rel (%p186) target = $region24
        $region23: #{vector_quantizer_forward.1} parent=11 // pred_region
          _
        $region24: #{vector_quantizer_forward.1} parent=11 // pred_fallthru
          _
      $region12: #{vector_quantizer_forward.1} parent=5 // pred_fallthru
        _
      %p189 = scmp.lt.s32.totalorder %s13, 2
      // Predicated region
      $region25: #{vector_quantizer_forward.1} parent=5 // pred_check
        %p190 = pneg %p189
      $region26: #{vector_quantizer_forward.1} parent=5 // pred_check_branch
        %192 = sbr.rel (%p190) target = $region28
      $region27: #{vector_quantizer_forward.1} parent=5 // pred_region
        // Predicated region
        $region29: #{vector_quantizer_forward.1} parent=27 // pred_check
          %p193 = pneg %p47
        $region30: #{vector_quantizer_forward.1} parent=27 // pred_check_branch
          %195 = sbr.rel (%p193) target = $region32
        $region31: #{vector_quantizer_forward.1} parent=27 // pred_region
          %s196 = smul.u32 2, %s21
          %p197 = scmp.lt.s32.totalorder %s20, 1
          %s198 = scalar_select %p197, %s20, 1
          %p199 = scmp.lt.s32.totalorder %s196, 1
          %s200 = scalar_select %p199, %s196, 1
          %s201 = smul.addr %s198, 16
          %s202 = sadd.s32 %s200, %s201
          %s203 = smul.addr %s202, 8
          %s204 = scalar_lea.vmem %s0, %s203
          %s205 = smul.u32 2, %s21
        $region32: #{vector_quantizer_forward.1} parent=27 // pred_fallthru
          _
      $region28: #{vector_quantizer_forward.1} parent=5 // pred_fallthru
        _
      %p206 = scmp.le.s32.totalorder 1, %s13
      %p207 = scmp.lt.s32.totalorder %s13, 3
      %p208 = pnand %p206, %p207
      %p209 = pneg %p208
      // Predicated region
      $region33: #{vector_quantizer_forward.1} parent=5 // pred_check
        _
      $region34: #{vector_quantizer_forward.1} parent=5 // pred_check_branch
        %211 = sbr.rel (%p208) target = $region36
      $region35: #{vector_quantizer_forward.1} parent=5 // pred_region
        %s212 = ssub.s32 %s13, 1
        %s213 = smul.u32 2, %s23
        %p214 = scmp.lt.s32.totalorder %s22, 1
        %s215 = scalar_select %p214, %s22, 1
        %p216 = scmp.lt.s32.totalorder %s213, 1
        %s217 = scalar_select %p216, %s213, 1
        %s218 = smul.addr %s215, 16
        %s219 = sadd.s32 %s217, %s218
        %s220 = smul.addr %s219, 8
        %s221 = scalar_lea.vmem %s0, %s220
        %p222 = pneg %p53
        %p223 = pneg %p50
        %p224 = pneg %p74
        %p225 = pneg %p71
        %p226 = pneg %p95
        %p227 = pneg %p92
        %p228 = pneg %p116
        %p229 = pneg %p113
        %p230 = pneg %p144
        %p231 = pneg %p141
        %s232 = smul.u32 2, %s23
        %p233 = scmp.lt.s32.totalorder %s22, 1
        %s234 = scalar_select %p233, %s22, 1
        %p235 = scmp.lt.s32.totalorder %s232, 1
        %s236 = scalar_select %p235, %s232, 1
        %s237 = smul.addr %s234, 16
        %s238 = sadd.s32 %s236, %s237
        %s239 = smul.addr %s238, 8
        %s240 = scalar_lea.vmem %s4, %s239
        %p241 = pneg %p165
        %p242 = pneg %p162
        %s243 = smul.u32 2, %s23
        %p244 = scmp.lt.s32.totalorder %s22, 1
        %s245 = scalar_select %p244, %s22, 1
        %p246 = scmp.lt.s32.totalorder %s243, 1
        %s247 = scalar_select %p246, %s243, 1
        %s248 = smul.addr %s245, 16
        %s249 = sadd.s32 %s247, %s248
        %s250 = smul.addr %s249, 8
        %s251 = scalar_lea.vmem %s0, %s250
        %s252 = smul.u32 2, %s23
        %s253 = smul.u32 2, %s23
        %p254 = scmp.lt.s32.totalorder %s22, 1
        %s255 = scalar_select %p254, %s22, 1
        %p256 = scmp.lt.s32.totalorder %s253, 1
        %s257 = scalar_select %p256, %s253, 1
        %s258 = smul.addr %s255, 16
        %s259 = sadd.s32 %s257, %s258
        %s260 = smul.addr %s259, 8
        %s261 = scalar_lea.vmem %s4, %s260
        %s262 = smul.u32 2, %s23
        %v263 = vld [vmem:[%s251] sm:$0xff]
        %v264 = vld [vmem:[%s251 + $0x8] sm:$0xff]
        %v265 = vld [vmem:[%s251 + $0x10] sm:$0xff]
        %v266 = vld [vmem:[%s251 + $0x18] sm:$0xff]
        %v267 = vld [vmem:[%s251 + $0x20] sm:$0xff]
        %v268 = vld [vmem:[%s251 + $0x28] sm:$0xff]
        %v269 = vld [vmem:[%s251 + $0x30] sm:$0xff]
        %v270 = vld [vmem:[%s251 + $0x38] sm:$0xff]
        %v271 = vld [vmem:[%s251 + $0x40] sm:$0xff]
        %v272 = vld [vmem:[%s251 + $0x48] sm:$0xff]
        %v273 = vld [vmem:[%s251 + $0x50] sm:$0xff]
        %v274 = vld [vmem:[%s251 + $0x58] sm:$0xff]
        %v275 = vld [vmem:[%s251 + $0x60] sm:$0xff]
        %v276 = vld [vmem:[%s251 + $0x68] sm:$0xff]
        %v277 = vld [vmem:[%s251 + $0x70] sm:$0xff]
        %v278 = vld [vmem:[%s251 + $0x78] sm:$0xff]
        %v279 = vld [vmem:[%s1] sm:$0xff]
        %v280 = vld [vmem:[%s1 + $0x8] sm:$0xff]
        %v281 = vld [vmem:[%s1 + $0x10] sm:$0xff]
        %v282 = vld [vmem:[%s1 + $0x18] sm:$0xff]
        %v283 = vld [vmem:[%s1 + $0x20] sm:$0xff]
        %v284 = vld [vmem:[%s1 + $0x28] sm:$0xff]
        %v285 = vld [vmem:[%s1 + $0x30] sm:$0xff]
        %v286 = vld [vmem:[%s1 + $0x38] sm:$0xff]
        %v287 = vld [vmem:[%s1 + $0x40] sm:$0xff]
        %v288 = vld [vmem:[%s1 + $0x48] sm:$0xff]
        %v289 = vld [vmem:[%s1 + $0x50] sm:$0xff]
        %v290 = vld [vmem:[%s1 + $0x58] sm:$0xff]
        %v291 = vld [vmem:[%s1 + $0x60] sm:$0xff]
        %v292 = vld [vmem:[%s1 + $0x68] sm:$0xff]
        %v293 = vld [vmem:[%s1 + $0x70] sm:$0xff]
        %v294 = vld [vmem:[%s1 + $0x78] sm:$0xff]
        %v295 = vld [vmem:[%s1 + $0x80] sm:$0xff]
        %v296 = vld [vmem:[%s1 + $0x88] sm:$0xff]
        %v297 = vld [vmem:[%s1 + $0x90] sm:$0xff]
        %v298 = vld [vmem:[%s1 + $0x98] sm:$0xff]
        %v299 = vld [vmem:[%s1 + $0xa0] sm:$0xff]
        %v300 = vld [vmem:[%s1 + $0xa8] sm:$0xff]
        %v301 = vld [vmem:[%s1 + $0xb0] sm:$0xff]
        %v302 = vld [vmem:[%s1 + $0xb8] sm:$0xff]
        %v303 = vld [vmem:[%s1 + $0xc0] sm:$0xff]
        %v304 = vld [vmem:[%s1 + $0xc8] sm:$0xff]
        %v305 = vld [vmem:[%s1 + $0xd0] sm:$0xff]
        %v306 = vld [vmem:[%s1 + $0xd8] sm:$0xff]
        %v307 = vld [vmem:[%s1 + $0xe0] sm:$0xff]
        %v308 = vld [vmem:[%s1 + $0xe8] sm:$0xff]
        %v309 = vld [vmem:[%s1 + $0xf0] sm:$0xff]
        %v310 = vld [vmem:[%s1 + $0xf8] sm:$0xff]
        %vm311 = vcmask 523264
        %v313 = vsel %vm311, %v279, 0
        %v316 = vsel %vm311, %v280, 0
        %v319 = vsel %vm311, %v281, 0
        %v322 = vsel %vm311, %v282, 0
        %v325 = vsel %vm311, %v283, 0
        %v328 = vsel %vm311, %v284, 0
        %v331 = vsel %vm311, %v285, 0
        %v334 = vsel %vm311, %v286, 0
        %v337 = vsel %vm311, %v287, 0
        %v340 = vsel %vm311, %v288, 0
        %v343 = vsel %vm311, %v289, 0
        %v346 = vsel %vm311, %v290, 0
        %v349 = vsel %vm311, %v291, 0
        %v352 = vsel %vm311, %v292, 0
        %v355 = vsel %vm311, %v293, 0
        %v358 = vsel %vm311, %v294, 0
        %v361 = vsel %vm311, %v295, 0
        %v364 = vsel %vm311, %v296, 0
        %v367 = vsel %vm311, %v297, 0
        %v370 = vsel %vm311, %v298, 0
        %v373 = vsel %vm311, %v299, 0
        %v376 = vsel %vm311, %v300, 0
        %v379 = vsel %vm311, %v301, 0
        %v382 = vsel %vm311, %v302, 0
        %v385 = vsel %vm311, %v303, 0
        %v388 = vsel %vm311, %v304, 0
        %v391 = vsel %vm311, %v305, 0
        %v394 = vsel %vm311, %v306, 0
        %v397 = vsel %vm311, %v307, 0
        %v400 = vsel %vm311, %v308, 0
        %v403 = vsel %vm311, %v309, 0
        %v406 = vsel %vm311, %v310, 0
        %408 = vmatpush.msra.mxu0 0.0
        %409 = vmatpush.msra.mxu0 0.0
        %410 = vmatpush.msra.mxu0 0.0
        %411 = vmatpush.msra.mxu0 0.0
        %412 = vmatpush.msra.mxu0 0.0
        %413 = vmatpush.msra.mxu0 0.0
        %414 = vmatpush.msra.mxu0 0.0
        %415 = vmatpush.msra.mxu0 0.0
        %416 = vmatpush.msra.mxu0 %v277
        %417 = vmatpush.msra.mxu0 %v275
        %418 = vmatpush.msra.mxu0 %v273
        %419 = vmatpush.msra.mxu0 %v271
        %420 = vmatpush.msra.mxu0 %v269
        %421 = vmatpush.msra.mxu0 %v267
        %422 = vmatpush.msra.mxu0 %v265
        %423 = vmatpush.msra.mxu0 %v263
        %424 = vmatmul.f32.gmra.mxu0 %v313
        %v425 = vpop.f32.mrf.mxu0
        %v426 = vadd.f32 0.0, %v425
        %427 = vmatmul.f32.gmra.mxu0 %v316
        %v428 = vpop.f32.mrf.mxu0
        %v429 = vadd.f32 0.0, %v428
        %430 = vmatmul.f32.gmra.mxu0 %v319
        %v431 = vpop.f32.mrf.mxu0
        %v432 = vadd.f32 0.0, %v431
        %433 = vmatmul.f32.gmra.mxu0 %v322
        %v434 = vpop.f32.mrf.mxu0
        %v435 = vadd.f32 0.0, %v434
        %436 = vmatmul.f32.gmra.mxu0 %v325
        %v437 = vpop.f32.mrf.mxu0
        %v438 = vadd.f32 0.0, %v437
        %439 = vmatmul.f32.gmra.mxu0 %v328
        %v440 = vpop.f32.mrf.mxu0
        %v441 = vadd.f32 0.0, %v440
        %442 = vmatmul.f32.gmra.mxu0 %v331
        %v443 = vpop.f32.mrf.mxu0
        %v444 = vadd.f32 0.0, %v443
        %445 = vmatmul.f32.gmra.mxu0 %v334
        %v446 = vpop.f32.mrf.mxu0
        %v447 = vadd.f32 0.0, %v446
        %448 = vmatmul.f32.gmra.mxu0 %v337
        %v449 = vpop.f32.mrf.mxu0
        %v450 = vadd.f32 0.0, %v449
        %451 = vmatmul.f32.gmra.mxu0 %v340
        %v452 = vpop.f32.mrf.mxu0
        %v453 = vadd.f32 0.0, %v452
        %454 = vmatmul.f32.gmra.mxu0 %v343
        %v455 = vpop.f32.mrf.mxu0
        %v456 = vadd.f32 0.0, %v455
        %457 = vmatmul.f32.gmra.mxu0 %v346
        %v458 = vpop.f32.mrf.mxu0
        %v459 = vadd.f32 0.0, %v458
        %460 = vmatmul.f32.gmra.mxu0 %v349
        %v461 = vpop.f32.mrf.mxu0
        %v462 = vadd.f32 0.0, %v461
        %463 = vmatmul.f32.gmra.mxu0 %v352
        %v464 = vpop.f32.mrf.mxu0
        %v465 = vadd.f32 0.0, %v464
        %466 = vmatmul.f32.gmra.mxu0 %v355
        %v467 = vpop.f32.mrf.mxu0
        %v468 = vadd.f32 0.0, %v467
        %469 = vmatmul.f32.gmra.mxu0 %v358
        %v470 = vpop.f32.mrf.mxu0
        %v471 = vadd.f32 0.0, %v470
        %472 = vmatmul.f32.gmra.mxu0 %v361
        %v473 = vpop.f32.mrf.mxu0
        %v474 = vadd.f32 0.0, %v473
        %475 = vmatmul.f32.gmra.mxu0 %v364
        %v476 = vpop.f32.mrf.mxu0
        %v477 = vadd.f32 0.0, %v476
        %478 = vmatmul.f32.gmra.mxu0 %v367
        %v479 = vpop.f32.mrf.mxu0
        %v480 = vadd.f32 0.0, %v479
        %481 = vmatmul.f32.gmra.mxu0 %v370
        %v482 = vpop.f32.mrf.mxu0
        %v483 = vadd.f32 0.0, %v482
        %484 = vmatmul.f32.gmra.mxu0 %v373
        %v485 = vpop.f32.mrf.mxu0
        %v486 = vadd.f32 0.0, %v485
        %487 = vmatmul.f32.gmra.mxu0 %v376
        %v488 = vpop.f32.mrf.mxu0
        %v489 = vadd.f32 0.0, %v488
        %490 = vmatmul.f32.gmra.mxu0 %v379
        %v491 = vpop.f32.mrf.mxu0
        %v492 = vadd.f32 0.0, %v491
        %493 = vmatmul.f32.gmra.mxu0 %v382
        %v494 = vpop.f32.mrf.mxu0
        %v495 = vadd.f32 0.0, %v494
        %496 = vmatmul.f32.gmra.mxu0 %v385
        %v497 = vpop.f32.mrf.mxu0
        %v498 = vadd.f32 0.0, %v497
        %499 = vmatmul.f32.gmra.mxu0 %v388
        %v500 = vpop.f32.mrf.mxu0
        %v501 = vadd.f32 0.0, %v500
        %502 = vmatmul.f32.gmra.mxu0 %v391
        %v503 = vpop.f32.mrf.mxu0
        %v504 = vadd.f32 0.0, %v503
        %505 = vmatmul.f32.gmra.mxu0 %v394
        %v506 = vpop.f32.mrf.mxu0
        %v507 = vadd.f32 0.0, %v506
        %508 = vmatmul.f32.gmra.mxu0 %v397
        %v509 = vpop.f32.mrf.mxu0
        %v510 = vadd.f32 0.0, %v509
        %511 = vmatmul.f32.gmra.mxu0 %v400
        %v512 = vpop.f32.mrf.mxu0
        %v513 = vadd.f32 0.0, %v512
        %514 = vmatmul.f32.gmra.mxu0 %v403
        %v515 = vpop.f32.mrf.mxu0
        %v516 = vadd.f32 0.0, %v515
        %517 = vmatmul.f32.gmra.mxu0 %v406
        %v518 = vpop.f32.mrf.mxu0
        %v519 = vadd.f32 0.0, %v518
        %520 = vdwg.mxu0
        %521 = vmatpush.msra.mxu0 0.0
        %522 = vmatpush.msra.mxu0 0.0
        %523 = vmatpush.msra.mxu0 0.0
        %524 = vmatpush.msra.mxu0 0.0
        %525 = vmatpush.msra.mxu0 0.0
        %526 = vmatpush.msra.mxu0 0.0
        %527 = vmatpush.msra.mxu0 0.0
        %528 = vmatpush.msra.mxu0 0.0
        %529 = vmatpush.msra.mxu0 %v278
        %530 = vmatpush.msra.mxu0 %v276
        %531 = vmatpush.msra.mxu0 %v274
        %532 = vmatpush.msra.mxu0 %v272
        %533 = vmatpush.msra.mxu0 %v270
        %534 = vmatpush.msra.mxu0 %v268
        %535 = vmatpush.msra.mxu0 %v266
        %536 = vmatpush.msra.mxu0 %v264
        %537 = vmatmul.f32.gmra.mxu0 %v313
        %v538 = vpop.f32.mrf.mxu0
        %v539 = vadd.f32 0.0, %v538
        %540 = vmatmul.f32.gmra.mxu0 %v316
        %v541 = vpop.f32.mrf.mxu0
        %v542 = vadd.f32 0.0, %v541
        %543 = vmatmul.f32.gmra.mxu0 %v319
        %v544 = vpop.f32.mrf.mxu0
        %v545 = vadd.f32 0.0, %v544
        %546 = vmatmul.f32.gmra.mxu0 %v322
        %v547 = vpop.f32.mrf.mxu0
        %v548 = vadd.f32 0.0, %v547
        %549 = vmatmul.f32.gmra.mxu0 %v325
        %v550 = vpop.f32.mrf.mxu0
        %v551 = vadd.f32 0.0, %v550
        %552 = vmatmul.f32.gmra.mxu0 %v328
        %v553 = vpop.f32.mrf.mxu0
        %v554 = vadd.f32 0.0, %v553
        %555 = vmatmul.f32.gmra.mxu0 %v331
        %v556 = vpop.f32.mrf.mxu0
        %v557 = vadd.f32 0.0, %v556
        %558 = vmatmul.f32.gmra.mxu0 %v334
        %v559 = vpop.f32.mrf.mxu0
        %v560 = vadd.f32 0.0, %v559
        %561 = vmatmul.f32.gmra.mxu0 %v337
        %v562 = vpop.f32.mrf.mxu0
        %v563 = vadd.f32 0.0, %v562
        %564 = vmatmul.f32.gmra.mxu0 %v340
        %v565 = vpop.f32.mrf.mxu0
        %v566 = vadd.f32 0.0, %v565
        %567 = vmatmul.f32.gmra.mxu0 %v343
        %v568 = vpop.f32.mrf.mxu0
        %v569 = vadd.f32 0.0, %v568
        %570 = vmatmul.f32.gmra.mxu0 %v346
        %v571 = vpop.f32.mrf.mxu0
        %v572 = vadd.f32 0.0, %v571
        %573 = vmatmul.f32.gmra.mxu0 %v349
        %v574 = vpop.f32.mrf.mxu0
        %v575 = vadd.f32 0.0, %v574
        %576 = vmatmul.f32.gmra.mxu0 %v352
        %v577 = vpop.f32.mrf.mxu0
        %v578 = vadd.f32 0.0, %v577
        %579 = vmatmul.f32.gmra.mxu0 %v355
        %v580 = vpop.f32.mrf.mxu0
        %v581 = vadd.f32 0.0, %v580
        %582 = vmatmul.f32.gmra.mxu0 %v358
        %v583 = vpop.f32.mrf.mxu0
        %v584 = vadd.f32 0.0, %v583
        %585 = vmatmul.f32.gmra.mxu0 %v361
        %v586 = vpop.f32.mrf.mxu0
        %v587 = vadd.f32 0.0, %v586
        %588 = vmatmul.f32.gmra.mxu0 %v364
        %v589 = vpop.f32.mrf.mxu0
        %v590 = vadd.f32 0.0, %v589
        %591 = vmatmul.f32.gmra.mxu0 %v367
        %v592 = vpop.f32.mrf.mxu0
        %v593 = vadd.f32 0.0, %v592
        %594 = vmatmul.f32.gmra.mxu0 %v370
        %v595 = vpop.f32.mrf.mxu0
        %v596 = vadd.f32 0.0, %v595
        %597 = vmatmul.f32.gmra.mxu0 %v373
        %v598 = vpop.f32.mrf.mxu0
        %v599 = vadd.f32 0.0, %v598
        %600 = vmatmul.f32.gmra.mxu0 %v376
        %v601 = vpop.f32.mrf.mxu0
        %v602 = vadd.f32 0.0, %v601
        %603 = vmatmul.f32.gmra.mxu0 %v379
        %v604 = vpop.f32.mrf.mxu0
        %v605 = vadd.f32 0.0, %v604
        %606 = vmatmul.f32.gmra.mxu0 %v382
        %v607 = vpop.f32.mrf.mxu0
        %v608 = vadd.f32 0.0, %v607
        %609 = vmatmul.f32.gmra.mxu0 %v385
        %v610 = vpop.f32.mrf.mxu0
        %v611 = vadd.f32 0.0, %v610
        %612 = vmatmul.f32.gmra.mxu0 %v388
        %v613 = vpop.f32.mrf.mxu0
        %v614 = vadd.f32 0.0, %v613
        %615 = vmatmul.f32.gmra.mxu0 %v391
        %v616 = vpop.f32.mrf.mxu0
        %v617 = vadd.f32 0.0, %v616
        %618 = vmatmul.f32.gmra.mxu0 %v394
        %v619 = vpop.f32.mrf.mxu0
        %v620 = vadd.f32 0.0, %v619
        %621 = vmatmul.f32.gmra.mxu0 %v397
        %v622 = vpop.f32.mrf.mxu0
        %v623 = vadd.f32 0.0, %v622
        %624 = vmatmul.f32.gmra.mxu0 %v400
        %v625 = vpop.f32.mrf.mxu0
        %v626 = vadd.f32 0.0, %v625
        %627 = vmatmul.f32.gmra.mxu0 %v403
        %v628 = vpop.f32.mrf.mxu0
        %v629 = vadd.f32 0.0, %v628
        %630 = vmatmul.f32.gmra.mxu0 %v406
        %v631 = vpop.f32.mrf.mxu0
        %v632 = vadd.f32 0.0, %v631
        %633 = vdwg.mxu0
        %v634 = vld [vmem:[%s3] sm:$0xff]
        %v635 = vld [vmem:[%s3 + $0x8] sm:$0xff]
        %v636 = vld [vmem:[%s3 + $0x10] sm:$0xff]
        %v637 = vld [vmem:[%s3 + $0x18] sm:$0xff]
        %v638 = vld [vmem:[%s3 + $0x20] sm:$0xff]
        %v639 = vld [vmem:[%s3 + $0x28] sm:$0xff]
        %v640 = vld [vmem:[%s3 + $0x30] sm:$0xff]
        %v641 = vld [vmem:[%s3 + $0x38] sm:$0xff]
        %v642 = vld [vmem:[%s3 + $0x40] sm:$0xff]
        %v643 = vld [vmem:[%s3 + $0x48] sm:$0xff]
        %v644 = vld [vmem:[%s3 + $0x50] sm:$0xff]
        %v645 = vld [vmem:[%s3 + $0x58] sm:$0xff]
        %v646 = vld [vmem:[%s3 + $0x60] sm:$0xff]
        %v647 = vld [vmem:[%s3 + $0x68] sm:$0xff]
        %v648 = vld [vmem:[%s3 + $0x70] sm:$0xff]
        %v649 = vld [vmem:[%s3 + $0x78] sm:$0xff]
        %v650 = vld [vmem:[%s3 + $0x80] sm:$0xff]
        %v651 = vld [vmem:[%s3 + $0x88] sm:$0xff]
        %v652 = vld [vmem:[%s3 + $0x90] sm:$0xff]
        %v653 = vld [vmem:[%s3 + $0x98] sm:$0xff]
        %v654 = vld [vmem:[%s3 + $0xa0] sm:$0xff]
        %v655 = vld [vmem:[%s3 + $0xa8] sm:$0xff]
        %v656 = vld [vmem:[%s3 + $0xb0] sm:$0xff]
        %v657 = vld [vmem:[%s3 + $0xb8] sm:$0xff]
        %v658 = vld [vmem:[%s3 + $0xc0] sm:$0xff]
        %v659 = vld [vmem:[%s3 + $0xc8] sm:$0xff]
        %v660 = vld [vmem:[%s3 + $0xd0] sm:$0xff]
        %v661 = vld [vmem:[%s3 + $0xd8] sm:$0xff]
        %v662 = vld [vmem:[%s3 + $0xe0] sm:$0xff]
        %v663 = vld [vmem:[%s3 + $0xe8] sm:$0xff]
        %v664 = vld [vmem:[%s3 + $0xf0] sm:$0xff]
        %v665 = vld [vmem:[%s3 + $0xf8] sm:$0xff]
        %667 = vset.pattern.permute.xlu0 0
        %668 = vperm.xlu0 %667, %v634
        %v669 = vpop.permute.xlu0 %668
        %672 = vset.pattern.permute.xlu0 0
        %673 = vperm.xlu0 %672, %v635
        %v674 = vpop.permute.xlu0 %673
        %677 = vset.pattern.permute.xlu0 0
        %678 = vperm.xlu0 %677, %v636
        %v679 = vpop.permute.xlu0 %678
        %682 = vset.pattern.permute.xlu0 0
        %683 = vperm.xlu0 %682, %v637
        %v684 = vpop.permute.xlu0 %683
        %687 = vset.pattern.permute.xlu0 0
        %688 = vperm.xlu0 %687, %v638
        %v689 = vpop.permute.xlu0 %688
        %692 = vset.pattern.permute.xlu0 0
        %693 = vperm.xlu0 %692, %v639
        %v694 = vpop.permute.xlu0 %693
        %697 = vset.pattern.permute.xlu0 0
        %698 = vperm.xlu0 %697, %v640
        %v699 = vpop.permute.xlu0 %698
        %702 = vset.pattern.permute.xlu0 0
        %703 = vperm.xlu0 %702, %v641
        %v704 = vpop.permute.xlu0 %703
        %707 = vset.pattern.permute.xlu0 0
        %708 = vperm.xlu0 %707, %v642
        %v709 = vpop.permute.xlu0 %708
        %712 = vset.pattern.permute.xlu0 0
        %713 = vperm.xlu0 %712, %v643
        %v714 = vpop.permute.xlu0 %713
        %717 = vset.pattern.permute.xlu0 0
        %718 = vperm.xlu0 %717, %v644
        %v719 = vpop.permute.xlu0 %718
        %722 = vset.pattern.permute.xlu0 0
        %723 = vperm.xlu0 %722, %v645
        %v724 = vpop.permute.xlu0 %723
        %727 = vset.pattern.permute.xlu0 0
        %728 = vperm.xlu0 %727, %v646
        %v729 = vpop.permute.xlu0 %728
        %732 = vset.pattern.permute.xlu0 0
        %733 = vperm.xlu0 %732, %v647
        %v734 = vpop.permute.xlu0 %733
        %737 = vset.pattern.permute.xlu0 0
        %738 = vperm.xlu0 %737, %v648
        %v739 = vpop.permute.xlu0 %738
        %742 = vset.pattern.permute.xlu0 0
        %743 = vperm.xlu0 %742, %v649
        %v744 = vpop.permute.xlu0 %743
        %747 = vset.pattern.permute.xlu0 0
        %748 = vperm.xlu0 %747, %v650
        %v749 = vpop.permute.xlu0 %748
        %752 = vset.pattern.permute.xlu0 0
        %753 = vperm.xlu0 %752, %v651
        %v754 = vpop.permute.xlu0 %753
        %757 = vset.pattern.permute.xlu0 0
        %758 = vperm.xlu0 %757, %v652
        %v759 = vpop.permute.xlu0 %758
        %762 = vset.pattern.permute.xlu0 0
        %763 = vperm.xlu0 %762, %v653
        %v764 = vpop.permute.xlu0 %763
        %767 = vset.pattern.permute.xlu0 0
        %768 = vperm.xlu0 %767, %v654
        %v769 = vpop.permute.xlu0 %768
        %772 = vset.pattern.permute.xlu0 0
        %773 = vperm.xlu0 %772, %v655
        %v774 = vpop.permute.xlu0 %773
        %777 = vset.pattern.permute.xlu0 0
        %778 = vperm.xlu0 %777, %v656
        %v779 = vpop.permute.xlu0 %778
        %782 = vset.pattern.permute.xlu0 0
        %783 = vperm.xlu0 %782, %v657
        %v784 = vpop.permute.xlu0 %783
        %787 = vset.pattern.permute.xlu0 0
        %788 = vperm.xlu0 %787, %v658
        %v789 = vpop.permute.xlu0 %788
        %792 = vset.pattern.permute.xlu0 0
        %793 = vperm.xlu0 %792, %v659
        %v794 = vpop.permute.xlu0 %793
        %797 = vset.pattern.permute.xlu0 0
        %798 = vperm.xlu0 %797, %v660
        %v799 = vpop.permute.xlu0 %798
        %802 = vset.pattern.permute.xlu0 0
        %803 = vperm.xlu0 %802, %v661
        %v804 = vpop.permute.xlu0 %803
        %807 = vset.pattern.permute.xlu0 0
        %808 = vperm.xlu0 %807, %v662
        %v809 = vpop.permute.xlu0 %808
        %812 = vset.pattern.permute.xlu0 0
        %813 = vperm.xlu0 %812, %v663
        %v814 = vpop.permute.xlu0 %813
        %817 = vset.pattern.permute.xlu0 0
        %818 = vperm.xlu0 %817, %v664
        %v819 = vpop.permute.xlu0 %818
        %822 = vset.pattern.permute.xlu0 0
        %823 = vperm.xlu0 %822, %v665
        %v824 = vpop.permute.xlu0 %823
        %v826 = vsub.f32 %v669, %v426
        %v827 = vsub.f32 %v669, %v539
        %v828 = vsub.f32 %v674, %v429
        %v829 = vsub.f32 %v674, %v542
        %v830 = vsub.f32 %v679, %v432
        %v831 = vsub.f32 %v679, %v545
        %v832 = vsub.f32 %v684, %v435
        %v833 = vsub.f32 %v684, %v548
        %v834 = vsub.f32 %v689, %v438
        %v835 = vsub.f32 %v689, %v551
        %v836 = vsub.f32 %v694, %v441
        %v837 = vsub.f32 %v694, %v554
        %v838 = vsub.f32 %v699, %v444
        %v839 = vsub.f32 %v699, %v557
        %v840 = vsub.f32 %v704, %v447
        %v841 = vsub.f32 %v704, %v560
        %v842 = vsub.f32 %v709, %v450
        %v843 = vsub.f32 %v709, %v563
        %v844 = vsub.f32 %v714, %v453
        %v845 = vsub.f32 %v714, %v566
        %v846 = vsub.f32 %v719, %v456
        %v847 = vsub.f32 %v719, %v569
        %v848 = vsub.f32 %v724, %v459
        %v849 = vsub.f32 %v724, %v572
        %v850 = vsub.f32 %v729, %v462
        %v851 = vsub.f32 %v729, %v575
        %v852 = vsub.f32 %v734, %v465
        %v853 = vsub.f32 %v734, %v578
        %v854 = vsub.f32 %v739, %v468
        %v855 = vsub.f32 %v739, %v581
        %v856 = vsub.f32 %v744, %v471
        %v857 = vsub.f32 %v744, %v584
        %v858 = vsub.f32 %v749, %v474
        %v859 = vsub.f32 %v749, %v587
        %v860 = vsub.f32 %v754, %v477
        %v861 = vsub.f32 %v754, %v590
        %v862 = vsub.f32 %v759, %v480
        %v863 = vsub.f32 %v759, %v593
        %v864 = vsub.f32 %v764, %v483
        %v865 = vsub.f32 %v764, %v596
        %v866 = vsub.f32 %v769, %v486
        %v867 = vsub.f32 %v769, %v599
        %v868 = vsub.f32 %v774, %v489
        %v869 = vsub.f32 %v774, %v602
        %v870 = vsub.f32 %v779, %v492
        %v871 = vsub.f32 %v779, %v605
        %v872 = vsub.f32 %v784, %v495
        %v873 = vsub.f32 %v784, %v608
        %v874 = vsub.f32 %v789, %v498
        %v875 = vsub.f32 %v789, %v611
        %v876 = vsub.f32 %v794, %v501
        %v877 = vsub.f32 %v794, %v614
        %v878 = vsub.f32 %v799, %v504
        %v879 = vsub.f32 %v799, %v617
        %v880 = vsub.f32 %v804, %v507
        %v881 = vsub.f32 %v804, %v620
        %v882 = vsub.f32 %v809, %v510
        %v883 = vsub.f32 %v809, %v623
        %v884 = vsub.f32 %v814, %v513
        %v885 = vsub.f32 %v814, %v626
        %v886 = vsub.f32 %v819, %v516
        %v887 = vsub.f32 %v819, %v629
        %v888 = vsub.f32 %v824, %v519
        %v889 = vsub.f32 %v824, %v632
        %v890 = vlaneseq
        %v891 = vshrl.u32 %v890, 7
        %v892 = vadd.s32 %v891, 8
        %v893 = vadd.s32 %v891, 16
        %v894 = vadd.s32 %v891, 24
        %v895 = vadd.s32 %v891, 32
        %v896 = vadd.s32 %v891, 40
        %v897 = vadd.s32 %v891, 48
        %v898 = vadd.s32 %v891, 56
        %v899 = vadd.s32 %v891, 64
        %v900 = vadd.s32 %v891, 72
        %v901 = vadd.s32 %v891, 80
        %v902 = vadd.s32 %v891, 88
        %v903 = vadd.s32 %v891, 96
        %v904 = vadd.s32 %v891, 104
        %v905 = vadd.s32 %v891, 112
        %v906 = vadd.s32 %v891, 120
        %v907 = vadd.s32 %v891, 128
        %v908 = vadd.s32 %v891, 136
        %v909 = vadd.s32 %v891, 144
        %v910 = vadd.s32 %v891, 152
        %v911 = vadd.s32 %v891, 160
        %v912 = vadd.s32 %v891, 168
        %v913 = vadd.s32 %v891, 176
        %v914 = vadd.s32 %v891, 184
        %v915 = vadd.s32 %v891, 192
        %v916 = vadd.s32 %v891, 200
        %v917 = vadd.s32 %v891, 208
        %v918 = vadd.s32 %v891, 216
        %v919 = vadd.s32 %v891, 224
        %v920 = vadd.s32 %v891, 232
        %v921 = vadd.s32 %v891, 240
        %v922 = vadd.s32 %v891, 248
        %v923 = vmin.f32 %v826, %v830
        %v924 = vmin.f32 %v828, %v832
        %v925 = vmin.f32 %v923, %v834
        %v926 = vmin.f32 %v924, %v836
        %v927 = vmin.f32 %v925, %v838
        %v928 = vmin.f32 %v926, %v840
        %v929 = vmin.f32 %v927, %v842
        %v930 = vmin.f32 %v928, %v844
        %v931 = vmin.f32 %v929, %v846
        %v932 = vmin.f32 %v930, %v848
        %v933 = vmin.f32 %v931, %v850
        %v934 = vmin.f32 %v932, %v852
        %v935 = vmin.f32 %v933, %v854
        %v936 = vmin.f32 %v934, %v856
        %v937 = vmin.f32 %v935, %v858
        %v938 = vmin.f32 %v936, %v860
        %v939 = vmin.f32 %v937, %v862
        %v940 = vmin.f32 %v938, %v864
        %v941 = vmin.f32 %v939, %v866
        %v942 = vmin.f32 %v940, %v868
        %v943 = vmin.f32 %v941, %v870
        %v944 = vmin.f32 %v942, %v872
        %v945 = vmin.f32 %v943, %v874
        %v946 = vmin.f32 %v944, %v876
        %v947 = vmin.f32 %v945, %v878
        %v948 = vmin.f32 %v946, %v880
        %v949 = vmin.f32 %v947, %v882
        %v950 = vmin.f32 %v948, %v884
        %v951 = vmin.f32 %v949, %v886
        %v952 = vmin.f32 %v950, %v888
        %v953 = vmin.f32 %v951, %v952
        %v954 = vrot.slane %v953, 4
        %v955 = vmin.f32 %v953, %v954
        %v956 = vrot.slane %v955, 2
        %v957 = vmin.f32 %v955, %v956
        %v958 = vrot.slane %v957, 1
        %v959 = vmin.f32 %v957, %v958
        %v960 = vmin.f32 %v827, %v831
        %v961 = vmin.f32 %v829, %v833
        %v962 = vmin.f32 %v960, %v835
        %v963 = vmin.f32 %v961, %v837
        %v964 = vmin.f32 %v962, %v839
        %v965 = vmin.f32 %v963, %v841
        %v966 = vmin.f32 %v964, %v843
        %v967 = vmin.f32 %v965, %v845
        %v968 = vmin.f32 %v966, %v847
        %v969 = vmin.f32 %v967, %v849
        %v970 = vmin.f32 %v968, %v851
        %v971 = vmin.f32 %v969, %v853
        %v972 = vmin.f32 %v970, %v855
        %v973 = vmin.f32 %v971, %v857
        %v974 = vmin.f32 %v972, %v859
        %v975 = vmin.f32 %v973, %v861
        %v976 = vmin.f32 %v974, %v863
        %v977 = vmin.f32 %v975, %v865
        %v978 = vmin.f32 %v976, %v867
        %v979 = vmin.f32 %v977, %v869
        %v980 = vmin.f32 %v978, %v871
        %v981 = vmin.f32 %v979, %v873
        %v982 = vmin.f32 %v980, %v875
        %v983 = vmin.f32 %v981, %v877
        %v984 = vmin.f32 %v982, %v879
        %v985 = vmin.f32 %v983, %v881
        %v986 = vmin.f32 %v984, %v883
        %v987 = vmin.f32 %v985, %v885
        %v988 = vmin.f32 %v986, %v887
        %v989 = vmin.f32 %v987, %v889
        %v990 = vmin.f32 %v988, %v989
        %v991 = vrot.slane %v990, 4
        %v992 = vmin.f32 %v990, %v991
        %v993 = vrot.slane %v992, 2
        %v994 = vmin.f32 %v992, %v993
        %v995 = vrot.slane %v994, 1
        %v996 = vmin.f32 %v994, %v995
        %vm997 = vcmp.eq.f32.partialorder %v826, %v959
        %vm998 = vcmp.eq.f32.partialorder %v827, %v996
        %vm999 = vcmp.eq.f32.partialorder %v828, %v959
        %vm1000 = vcmp.eq.f32.partialorder %v829, %v996
        %vm1001 = vcmp.eq.f32.partialorder %v830, %v959
        %vm1002 = vcmp.eq.f32.partialorder %v831, %v996
        %vm1003 = vcmp.eq.f32.partialorder %v832, %v959
        %vm1004 = vcmp.eq.f32.partialorder %v833, %v996
        %vm1005 = vcmp.eq.f32.partialorder %v834, %v959
        %vm1006 = vcmp.eq.f32.partialorder %v835, %v996
        %vm1007 = vcmp.eq.f32.partialorder %v836, %v959
        %vm1008 = vcmp.eq.f32.partialorder %v837, %v996
        %vm1009 = vcmp.eq.f32.partialorder %v838, %v959
        %vm1010 = vcmp.eq.f32.partialorder %v839, %v996
        %vm1011 = vcmp.eq.f32.partialorder %v840, %v959
        %vm1012 = vcmp.eq.f32.partialorder %v841, %v996
        %vm1013 = vcmp.eq.f32.partialorder %v842, %v959
        %vm1014 = vcmp.eq.f32.partialorder %v843, %v996
        %vm1015 = vcmp.eq.f32.partialorder %v844, %v959
        %vm1016 = vcmp.eq.f32.partialorder %v845, %v996
        %vm1017 = vcmp.eq.f32.partialorder %v846, %v959
        %vm1018 = vcmp.eq.f32.partialorder %v847, %v996
        %vm1019 = vcmp.eq.f32.partialorder %v848, %v959
        %vm1020 = vcmp.eq.f32.partialorder %v849, %v996
        %vm1021 = vcmp.eq.f32.partialorder %v850, %v959
        %vm1022 = vcmp.eq.f32.partialorder %v851, %v996
        %vm1023 = vcmp.eq.f32.partialorder %v852, %v959
        %vm1024 = vcmp.eq.f32.partialorder %v853, %v996
        %vm1025 = vcmp.eq.f32.partialorder %v854, %v959
        %vm1026 = vcmp.eq.f32.partialorder %v855, %v996
        %vm1027 = vcmp.eq.f32.partialorder %v856, %v959
        %vm1028 = vcmp.eq.f32.partialorder %v857, %v996
        %vm1029 = vcmp.eq.f32.partialorder %v858, %v959
        %vm1030 = vcmp.eq.f32.partialorder %v859, %v996
        %vm1031 = vcmp.eq.f32.partialorder %v860, %v959
        %vm1032 = vcmp.eq.f32.partialorder %v861, %v996
        %vm1033 = vcmp.eq.f32.partialorder %v862, %v959
        %vm1034 = vcmp.eq.f32.partialorder %v863, %v996
        %vm1035 = vcmp.eq.f32.partialorder %v864, %v959
        %vm1036 = vcmp.eq.f32.partialorder %v865, %v996
        %vm1037 = vcmp.eq.f32.partialorder %v866, %v959
        %vm1038 = vcmp.eq.f32.partialorder %v867, %v996
        %vm1039 = vcmp.eq.f32.partialorder %v868, %v959
        %vm1040 = vcmp.eq.f32.partialorder %v869, %v996
        %vm1041 = vcmp.eq.f32.partialorder %v870, %v959
        %vm1042 = vcmp.eq.f32.partialorder %v871, %v996
        %vm1043 = vcmp.eq.f32.partialorder %v872, %v959
        %vm1044 = vcmp.eq.f32.partialorder %v873, %v996
        %vm1045 = vcmp.eq.f32.partialorder %v874, %v959
        %vm1046 = vcmp.eq.f32.partialorder %v875, %v996
        %vm1047 = vcmp.eq.f32.partialorder %v876, %v959
        %vm1048 = vcmp.eq.f32.partialorder %v877, %v996
        %vm1049 = vcmp.eq.f32.partialorder %v878, %v959
        %vm1050 = vcmp.eq.f32.partialorder %v879, %v996
        %vm1051 = vcmp.eq.f32.partialorder %v880, %v959
        %vm1052 = vcmp.eq.f32.partialorder %v881, %v996
        %vm1053 = vcmp.eq.f32.partialorder %v882, %v959
        %vm1054 = vcmp.eq.f32.partialorder %v883, %v996
        %vm1055 = vcmp.eq.f32.partialorder %v884, %v959
        %vm1056 = vcmp.eq.f32.partialorder %v885, %v996
        %vm1057 = vcmp.eq.f32.partialorder %v886, %v959
        %vm1058 = vcmp.eq.f32.partialorder %v887, %v996
        %vm1059 = vcmp.eq.f32.partialorder %v888, %v959
        %vm1060 = vcmp.eq.f32.partialorder %v889, %v996
        %v1061 = vsel %vm997, %v891, 256
        %v1062 = vsel %vm998, %v891, 256
        %v1063 = vsel %vm999, %v892, 256
        %v1064 = vsel %vm1000, %v892, 256
        %v1065 = vsel %vm1001, %v893, 256
        %v1066 = vsel %vm1002, %v893, 256
        %v1067 = vsel %vm1003, %v894, 256
        %v1068 = vsel %vm1004, %v894, 256
        %v1069 = vsel %vm1005, %v895, 256
        %v1070 = vsel %vm1006, %v895, 256
        %v1071 = vsel %vm1007, %v896, 256
        %v1072 = vsel %vm1008, %v896, 256
        %v1073 = vsel %vm1009, %v897, 256
        %v1074 = vsel %vm1010, %v897, 256
        %v1075 = vsel %vm1011, %v898, 256
        %v1076 = vsel %vm1012, %v898, 256
        %v1077 = vsel %vm1013, %v899, 256
        %v1078 = vsel %vm1014, %v899, 256
        %v1079 = vsel %vm1015, %v900, 256
        %v1080 = vsel %vm1016, %v900, 256
        %v1081 = vsel %vm1017, %v901, 256
        %v1082 = vsel %vm1018, %v901, 256
        %v1083 = vsel %vm1019, %v902, 256
        %v1084 = vsel %vm1020, %v902, 256
        %v1085 = vsel %vm1021, %v903, 256
        %v1086 = vsel %vm1022, %v903, 256
        %v1087 = vsel %vm1023, %v904, 256
        %v1088 = vsel %vm1024, %v904, 256
        %v1089 = vsel %vm1025, %v905, 256
        %v1090 = vsel %vm1026, %v905, 256
        %v1091 = vsel %vm1027, %v906, 256
        %v1092 = vsel %vm1028, %v906, 256
        %v1093 = vsel %vm1029, %v907, 256
        %v1094 = vsel %vm1030, %v907, 256
        %v1095 = vsel %vm1031, %v908, 256
        %v1096 = vsel %vm1032, %v908, 256
        %v1097 = vsel %vm1033, %v909, 256
        %v1098 = vsel %vm1034, %v909, 256
        %v1099 = vsel %vm1035, %v910, 256
        %v1100 = vsel %vm1036, %v910, 256
        %v1101 = vsel %vm1037, %v911, 256
        %v1102 = vsel %vm1038, %v911, 256
        %v1103 = vsel %vm1039, %v912, 256
        %v1104 = vsel %vm1040, %v912, 256
        %v1105 = vsel %vm1041, %v913, 256
        %v1106 = vsel %vm1042, %v913, 256
        %v1107 = vsel %vm1043, %v914, 256
        %v1108 = vsel %vm1044, %v914, 256
        %v1109 = vsel %vm1045, %v915, 256
        %v1110 = vsel %vm1046, %v915, 256
        %v1111 = vsel %vm1047, %v916, 256
        %v1112 = vsel %vm1048, %v916, 256
        %v1113 = vsel %vm1049, %v917, 256
        %v1114 = vsel %vm1050, %v917, 256
        %v1115 = vsel %vm1051, %v918, 256
        %v1116 = vsel %vm1052, %v918, 256
        %v1117 = vsel %vm1053, %v919, 256
        %v1118 = vsel %vm1054, %v919, 256
        %v1119 = vsel %vm1055, %v920, 256
        %v1120 = vsel %vm1056, %v920, 256
        %v1121 = vsel %vm1057, %v921, 256
        %v1122 = vsel %vm1058, %v921, 256
        %v1123 = vsel %vm1059, %v922, 256
        %v1124 = vsel %vm1060, %v922, 256
        %vm1125 = vcmp.lt.s32.totalorder %v1061, %v1065
        %v1126 = vsel %vm1125, %v1061, %v1065
        %vm1127 = vcmp.lt.s32.totalorder %v1063, %v1067
        %v1128 = vsel %vm1127, %v1063, %v1067
        %vm1129 = vcmp.lt.s32.totalorder %v1126, %v1069
        %v1130 = vsel %vm1129, %v1126, %v1069
        %vm1131 = vcmp.lt.s32.totalorder %v1128, %v1071
        %v1132 = vsel %vm1131, %v1128, %v1071
        %vm1133 = vcmp.lt.s32.totalorder %v1130, %v1073
        %v1134 = vsel %vm1133, %v1130, %v1073
        %vm1135 = vcmp.lt.s32.totalorder %v1132, %v1075
        %v1136 = vsel %vm1135, %v1132, %v1075
        %vm1137 = vcmp.lt.s32.totalorder %v1134, %v1077
        %v1138 = vsel %vm1137, %v1134, %v1077
        %vm1139 = vcmp.lt.s32.totalorder %v1136, %v1079
        %v1140 = vsel %vm1139, %v1136, %v1079
        %vm1141 = vcmp.lt.s32.totalorder %v1138, %v1081
        %v1142 = vsel %vm1141, %v1138, %v1081
        %vm1143 = vcmp.lt.s32.totalorder %v1140, %v1083
        %v1144 = vsel %vm1143, %v1140, %v1083
        %vm1145 = vcmp.lt.s32.totalorder %v1142, %v1085
        %v1146 = vsel %vm1145, %v1142, %v1085
        %vm1147 = vcmp.lt.s32.totalorder %v1144, %v1087
        %v1148 = vsel %vm1147, %v1144, %v1087
        %vm1149 = vcmp.lt.s32.totalorder %v1146, %v1089
        %v1150 = vsel %vm1149, %v1146, %v1089
        %vm1151 = vcmp.lt.s32.totalorder %v1148, %v1091
        %v1152 = vsel %vm1151, %v1148, %v1091
        %vm1153 = vcmp.lt.s32.totalorder %v1150, %v1093
        %v1154 = vsel %vm1153, %v1150, %v1093
        %vm1155 = vcmp.lt.s32.totalorder %v1152, %v1095
        %v1156 = vsel %vm1155, %v1152, %v1095
        %vm1157 = vcmp.lt.s32.totalorder %v1154, %v1097
        %v1158 = vsel %vm1157, %v1154, %v1097
        %vm1159 = vcmp.lt.s32.totalorder %v1156, %v1099
        %v1160 = vsel %vm1159, %v1156, %v1099
        %vm1161 = vcmp.lt.s32.totalorder %v1158, %v1101
        %v1162 = vsel %vm1161, %v1158, %v1101
        %vm1163 = vcmp.lt.s32.totalorder %v1160, %v1103
        %v1164 = vsel %vm1163, %v1160, %v1103
        %vm1165 = vcmp.lt.s32.totalorder %v1162, %v1105
        %v1166 = vsel %vm1165, %v1162, %v1105
        %vm1167 = vcmp.lt.s32.totalorder %v1164, %v1107
        %v1168 = vsel %vm1167, %v1164, %v1107
        %vm1169 = vcmp.lt.s32.totalorder %v1166, %v1109
        %v1170 = vsel %vm1169, %v1166, %v1109
        %vm1171 = vcmp.lt.s32.totalorder %v1168, %v1111
        %v1172 = vsel %vm1171, %v1168, %v1111
        %vm1173 = vcmp.lt.s32.totalorder %v1170, %v1113
        %v1174 = vsel %vm1173, %v1170, %v1113
        %vm1175 = vcmp.lt.s32.totalorder %v1172, %v1115
        %v1176 = vsel %vm1175, %v1172, %v1115
        %vm1177 = vcmp.lt.s32.totalorder %v1174, %v1117
        %v1178 = vsel %vm1177, %v1174, %v1117
        %vm1179 = vcmp.lt.s32.totalorder %v1176, %v1119
        %v1180 = vsel %vm1179, %v1176, %v1119
        %vm1181 = vcmp.lt.s32.totalorder %v1178, %v1121
        %v1182 = vsel %vm1181, %v1178, %v1121
        %vm1183 = vcmp.lt.s32.totalorder %v1180, %v1123
        %v1184 = vsel %vm1183, %v1180, %v1123
        %vm1185 = vcmp.lt.s32.totalorder %v1182, %v1184
        %v1186 = vsel %vm1185, %v1182, %v1184
        %v1187 = vrot.slane %v1186, 4
        %vm1188 = vcmp.lt.s32.totalorder %v1186, %v1187
        %v1189 = vsel %vm1188, %v1186, %v1187
        %v1190 = vrot.slane %v1189, 2
        %vm1191 = vcmp.lt.s32.totalorder %v1189, %v1190
        %v1192 = vsel %vm1191, %v1189, %v1190
        %v1193 = vrot.slane %v1192, 1
        %vm1194 = vcmp.lt.s32.totalorder %v1192, %v1193
        %v1195 = vsel %vm1194, %v1192, %v1193
        %vm1196 = vcmp.lt.s32.totalorder %v1062, %v1066
        %v1197 = vsel %vm1196, %v1062, %v1066
        %vm1198 = vcmp.lt.s32.totalorder %v1064, %v1068
        %v1199 = vsel %vm1198, %v1064, %v1068
        %vm1200 = vcmp.lt.s32.totalorder %v1197, %v1070
        %v1201 = vsel %vm1200, %v1197, %v1070
        %vm1202 = vcmp.lt.s32.totalorder %v1199, %v1072
        %v1203 = vsel %vm1202, %v1199, %v1072
        %vm1204 = vcmp.lt.s32.totalorder %v1201, %v1074
        %v1205 = vsel %vm1204, %v1201, %v1074
        %vm1206 = vcmp.lt.s32.totalorder %v1203, %v1076
        %v1207 = vsel %vm1206, %v1203, %v1076
        %vm1208 = vcmp.lt.s32.totalorder %v1205, %v1078
        %v1209 = vsel %vm1208, %v1205, %v1078
        %vm1210 = vcmp.lt.s32.totalorder %v1207, %v1080
        %v1211 = vsel %vm1210, %v1207, %v1080
        %vm1212 = vcmp.lt.s32.totalorder %v1209, %v1082
        %v1213 = vsel %vm1212, %v1209, %v1082
        %vm1214 = vcmp.lt.s32.totalorder %v1211, %v1084
        %v1215 = vsel %vm1214, %v1211, %v1084
        %vm1216 = vcmp.lt.s32.totalorder %v1213, %v1086
        %v1217 = vsel %vm1216, %v1213, %v1086
        %vm1218 = vcmp.lt.s32.totalorder %v1215, %v1088
        %v1219 = vsel %vm1218, %v1215, %v1088
        %vm1220 = vcmp.lt.s32.totalorder %v1217, %v1090
        %v1221 = vsel %vm1220, %v1217, %v1090
        %vm1222 = vcmp.lt.s32.totalorder %v1219, %v1092
        %v1223 = vsel %vm1222, %v1219, %v1092
        %vm1224 = vcmp.lt.s32.totalorder %v1221, %v1094
        %v1225 = vsel %vm1224, %v1221, %v1094
        %vm1226 = vcmp.lt.s32.totalorder %v1223, %v1096
        %v1227 = vsel %vm1226, %v1223, %v1096
        %vm1228 = vcmp.lt.s32.totalorder %v1225, %v1098
        %v1229 = vsel %vm1228, %v1225, %v1098
        %vm1230 = vcmp.lt.s32.totalorder %v1227, %v1100
        %v1231 = vsel %vm1230, %v1227, %v1100
        %vm1232 = vcmp.lt.s32.totalorder %v1229, %v1102
        %v1233 = vsel %vm1232, %v1229, %v1102
        %vm1234 = vcmp.lt.s32.totalorder %v1231, %v1104
        %v1235 = vsel %vm1234, %v1231, %v1104
        %vm1236 = vcmp.lt.s32.totalorder %v1233, %v1106
        %v1237 = vsel %vm1236, %v1233, %v1106
        %vm1238 = vcmp.lt.s32.totalorder %v1235, %v1108
        %v1239 = vsel %vm1238, %v1235, %v1108
        %vm1240 = vcmp.lt.s32.totalorder %v1237, %v1110
        %v1241 = vsel %vm1240, %v1237, %v1110
        %vm1242 = vcmp.lt.s32.totalorder %v1239, %v1112
        %v1243 = vsel %vm1242, %v1239, %v1112
        %vm1244 = vcmp.lt.s32.totalorder %v1241, %v1114
        %v1245 = vsel %vm1244, %v1241, %v1114
        %vm1246 = vcmp.lt.s32.totalorder %v1243, %v1116
        %v1247 = vsel %vm1246, %v1243, %v1116
        %vm1248 = vcmp.lt.s32.totalorder %v1245, %v1118
        %v1249 = vsel %vm1248, %v1245, %v1118
        %vm1250 = vcmp.lt.s32.totalorder %v1247, %v1120
        %v1251 = vsel %vm1250, %v1247, %v1120
        %vm1252 = vcmp.lt.s32.totalorder %v1249, %v1122
        %v1253 = vsel %vm1252, %v1249, %v1122
        %vm1254 = vcmp.lt.s32.totalorder %v1251, %v1124
        %v1255 = vsel %vm1254, %v1251, %v1124
        %vm1256 = vcmp.lt.s32.totalorder %v1253, %v1255
        %v1257 = vsel %vm1256, %v1253, %v1255
        %v1258 = vrot.slane %v1257, 4
        %vm1259 = vcmp.lt.s32.totalorder %v1257, %v1258
        %v1260 = vsel %vm1259, %v1257, %v1258
        %v1261 = vrot.slane %v1260, 2
        %vm1262 = vcmp.lt.s32.totalorder %v1260, %v1261
        %v1263 = vsel %vm1262, %v1260, %v1261
        %v1264 = vrot.slane %v1263, 1
        %vm1265 = vcmp.lt.s32.totalorder %v1263, %v1264
        %v1266 = vsel %vm1265, %v1263, %v1264
        %vm1267 = vcmp.eq.s32.totalorder %v891, %v1195
        %vm1268 = vcmp.eq.s32.totalorder %v891, %v1266
        %vm1269 = vcmp.eq.s32.totalorder %v892, %v1195
        %vm1270 = vcmp.eq.s32.totalorder %v892, %v1266
        %vm1271 = vcmp.eq.s32.totalorder %v893, %v1195
        %vm1272 = vcmp.eq.s32.totalorder %v893, %v1266
        %vm1273 = vcmp.eq.s32.totalorder %v894, %v1195
        %vm1274 = vcmp.eq.s32.totalorder %v894, %v1266
        %vm1275 = vcmp.eq.s32.totalorder %v895, %v1195
        %vm1276 = vcmp.eq.s32.totalorder %v895, %v1266
        %vm1277 = vcmp.eq.s32.totalorder %v896, %v1195
        %vm1278 = vcmp.eq.s32.totalorder %v896, %v1266
        %vm1279 = vcmp.eq.s32.totalorder %v897, %v1195
        %vm1280 = vcmp.eq.s32.totalorder %v897, %v1266
        %vm1281 = vcmp.eq.s32.totalorder %v898, %v1195
        %vm1282 = vcmp.eq.s32.totalorder %v898, %v1266
        %vm1283 = vcmp.eq.s32.totalorder %v899, %v1195
        %vm1284 = vcmp.eq.s32.totalorder %v899, %v1266
        %vm1285 = vcmp.eq.s32.totalorder %v900, %v1195
        %vm1286 = vcmp.eq.s32.totalorder %v900, %v1266
        %vm1287 = vcmp.eq.s32.totalorder %v901, %v1195
        %vm1288 = vcmp.eq.s32.totalorder %v901, %v1266
        %vm1289 = vcmp.eq.s32.totalorder %v902, %v1195
        %vm1290 = vcmp.eq.s32.totalorder %v902, %v1266
        %vm1291 = vcmp.eq.s32.totalorder %v903, %v1195
        %vm1292 = vcmp.eq.s32.totalorder %v903, %v1266
        %vm1293 = vcmp.eq.s32.totalorder %v904, %v1195
        %vm1294 = vcmp.eq.s32.totalorder %v904, %v1266
        %vm1295 = vcmp.eq.s32.totalorder %v905, %v1195
        %vm1296 = vcmp.eq.s32.totalorder %v905, %v1266
        %vm1297 = vcmp.eq.s32.totalorder %v906, %v1195
        %vm1298 = vcmp.eq.s32.totalorder %v906, %v1266
        %vm1299 = vcmp.eq.s32.totalorder %v907, %v1195
        %vm1300 = vcmp.eq.s32.totalorder %v907, %v1266
        %vm1301 = vcmp.eq.s32.totalorder %v908, %v1195
        %vm1302 = vcmp.eq.s32.totalorder %v908, %v1266
        %vm1303 = vcmp.eq.s32.totalorder %v909, %v1195
        %vm1304 = vcmp.eq.s32.totalorder %v909, %v1266
        %vm1305 = vcmp.eq.s32.totalorder %v910, %v1195
        %vm1306 = vcmp.eq.s32.totalorder %v910, %v1266
        %vm1307 = vcmp.eq.s32.totalorder %v911, %v1195
        %vm1308 = vcmp.eq.s32.totalorder %v911, %v1266
        %vm1309 = vcmp.eq.s32.totalorder %v912, %v1195
        %vm1310 = vcmp.eq.s32.totalorder %v912, %v1266
        %vm1311 = vcmp.eq.s32.totalorder %v913, %v1195
        %vm1312 = vcmp.eq.s32.totalorder %v913, %v1266
        %vm1313 = vcmp.eq.s32.totalorder %v914, %v1195
        %vm1314 = vcmp.eq.s32.totalorder %v914, %v1266
        %vm1315 = vcmp.eq.s32.totalorder %v915, %v1195
        %vm1316 = vcmp.eq.s32.totalorder %v915, %v1266
        %vm1317 = vcmp.eq.s32.totalorder %v916, %v1195
        %vm1318 = vcmp.eq.s32.totalorder %v916, %v1266
        %vm1319 = vcmp.eq.s32.totalorder %v917, %v1195
        %vm1320 = vcmp.eq.s32.totalorder %v917, %v1266
        %vm1321 = vcmp.eq.s32.totalorder %v918, %v1195
        %vm1322 = vcmp.eq.s32.totalorder %v918, %v1266
        %vm1323 = vcmp.eq.s32.totalorder %v919, %v1195
        %vm1324 = vcmp.eq.s32.totalorder %v919, %v1266
        %vm1325 = vcmp.eq.s32.totalorder %v920, %v1195
        %vm1326 = vcmp.eq.s32.totalorder %v920, %v1266
        %vm1327 = vcmp.eq.s32.totalorder %v921, %v1195
        %vm1328 = vcmp.eq.s32.totalorder %v921, %v1266
        %vm1329 = vcmp.eq.s32.totalorder %v922, %v1195
        %vm1330 = vcmp.eq.s32.totalorder %v922, %v1266
        %v1331 = vsel %vm1267, 1, 0
        %v1332 = vsel %vm1268, 1, 0
        %v1333 = vsel %vm1269, 1, 0
        %v1334 = vsel %vm1270, 1, 0
        %v1335 = vsel %vm1271, 1, 0
        %v1336 = vsel %vm1272, 1, 0
        %v1337 = vsel %vm1273, 1, 0
        %v1338 = vsel %vm1274, 1, 0
        %v1339 = vsel %vm1275, 1, 0
        %v1340 = vsel %vm1276, 1, 0
        %v1341 = vsel %vm1277, 1, 0
        %v1342 = vsel %vm1278, 1, 0
        %v1343 = vsel %vm1279, 1, 0
        %v1344 = vsel %vm1280, 1, 0
        %v1345 = vsel %vm1281, 1, 0
        %v1346 = vsel %vm1282, 1, 0
        %v1347 = vsel %vm1283, 1, 0
        %v1348 = vsel %vm1284, 1, 0
        %v1349 = vsel %vm1285, 1, 0
        %v1350 = vsel %vm1286, 1, 0
        %v1351 = vsel %vm1287, 1, 0
        %v1352 = vsel %vm1288, 1, 0
        %v1353 = vsel %vm1289, 1, 0
        %v1354 = vsel %vm1290, 1, 0
        %v1355 = vsel %vm1291, 1, 0
        %v1356 = vsel %vm1292, 1, 0
        %v1357 = vsel %vm1293, 1, 0
        %v1358 = vsel %vm1294, 1, 0
        %v1359 = vsel %vm1295, 1, 0
        %v1360 = vsel %vm1296, 1, 0
        %v1361 = vsel %vm1297, 1, 0
        %v1362 = vsel %vm1298, 1, 0
        %v1363 = vsel %vm1299, 1, 0
        %v1364 = vsel %vm1300, 1, 0
        %v1365 = vsel %vm1301, 1, 0
        %v1366 = vsel %vm1302, 1, 0
        %v1367 = vsel %vm1303, 1, 0
        %v1368 = vsel %vm1304, 1, 0
        %v1369 = vsel %vm1305, 1, 0
        %v1370 = vsel %vm1306, 1, 0
        %v1371 = vsel %vm1307, 1, 0
        %v1372 = vsel %vm1308, 1, 0
        %v1373 = vsel %vm1309, 1, 0
        %v1374 = vsel %vm1310, 1, 0
        %v1375 = vsel %vm1311, 1, 0
        %v1376 = vsel %vm1312, 1, 0
        %v1377 = vsel %vm1313, 1, 0
        %v1378 = vsel %vm1314, 1, 0
        %v1379 = vsel %vm1315, 1, 0
        %v1380 = vsel %vm1316, 1, 0
        %v1381 = vsel %vm1317, 1, 0
        %v1382 = vsel %vm1318, 1, 0
        %v1383 = vsel %vm1319, 1, 0
        %v1384 = vsel %vm1320, 1, 0
        %v1385 = vsel %vm1321, 1, 0
        %v1386 = vsel %vm1322, 1, 0
        %v1387 = vsel %vm1323, 1, 0
        %v1388 = vsel %vm1324, 1, 0
        %v1389 = vsel %vm1325, 1, 0
        %v1390 = vsel %vm1326, 1, 0
        %v1391 = vsel %vm1327, 1, 0
        %v1392 = vsel %vm1328, 1, 0
        %v1393 = vsel %vm1329, 1, 0
        %v1394 = vsel %vm1330, 1, 0
        %v1395 = vcvt.s32.f32 %v1331
        %v1396 = vcvt.s32.f32 %v1332
        %v1397 = vcvt.s32.f32 %v1333
        %v1398 = vcvt.s32.f32 %v1334
        %v1399 = vcvt.s32.f32 %v1335
        %v1400 = vcvt.s32.f32 %v1336
        %v1401 = vcvt.s32.f32 %v1337
        %v1402 = vcvt.s32.f32 %v1338
        %v1403 = vcvt.s32.f32 %v1339
        %v1404 = vcvt.s32.f32 %v1340
        %v1405 = vcvt.s32.f32 %v1341
        %v1406 = vcvt.s32.f32 %v1342
        %v1407 = vcvt.s32.f32 %v1343
        %v1408 = vcvt.s32.f32 %v1344
        %v1409 = vcvt.s32.f32 %v1345
        %v1410 = vcvt.s32.f32 %v1346
        %v1411 = vcvt.s32.f32 %v1347
        %v1412 = vcvt.s32.f32 %v1348
        %v1413 = vcvt.s32.f32 %v1349
        %v1414 = vcvt.s32.f32 %v1350
        %v1415 = vcvt.s32.f32 %v1351
        %v1416 = vcvt.s32.f32 %v1352
        %v1417 = vcvt.s32.f32 %v1353
        %v1418 = vcvt.s32.f32 %v1354
        %v1419 = vcvt.s32.f32 %v1355
        %v1420 = vcvt.s32.f32 %v1356
        %v1421 = vcvt.s32.f32 %v1357
        %v1422 = vcvt.s32.f32 %v1358
        %v1423 = vcvt.s32.f32 %v1359
        %v1424 = vcvt.s32.f32 %v1360
        %v1425 = vcvt.s32.f32 %v1361
        %v1426 = vcvt.s32.f32 %v1362
        %v1427 = vcvt.s32.f32 %v1363
        %v1428 = vcvt.s32.f32 %v1364
        %v1429 = vcvt.s32.f32 %v1365
        %v1430 = vcvt.s32.f32 %v1366
        %v1431 = vcvt.s32.f32 %v1367
        %v1432 = vcvt.s32.f32 %v1368
        %v1433 = vcvt.s32.f32 %v1369
        %v1434 = vcvt.s32.f32 %v1370
        %v1435 = vcvt.s32.f32 %v1371
        %v1436 = vcvt.s32.f32 %v1372
        %v1437 = vcvt.s32.f32 %v1373
        %v1438 = vcvt.s32.f32 %v1374
        %v1439 = vcvt.s32.f32 %v1375
        %v1440 = vcvt.s32.f32 %v1376
        %v1441 = vcvt.s32.f32 %v1377
        %v1442 = vcvt.s32.f32 %v1378
        %v1443 = vcvt.s32.f32 %v1379
        %v1444 = vcvt.s32.f32 %v1380
        %v1445 = vcvt.s32.f32 %v1381
        %v1446 = vcvt.s32.f32 %v1382
        %v1447 = vcvt.s32.f32 %v1383
        %v1448 = vcvt.s32.f32 %v1384
        %v1449 = vcvt.s32.f32 %v1385
        %v1450 = vcvt.s32.f32 %v1386
        %v1451 = vcvt.s32.f32 %v1387
        %v1452 = vcvt.s32.f32 %v1388
        %v1453 = vcvt.s32.f32 %v1389
        %v1454 = vcvt.s32.f32 %v1390
        %v1455 = vcvt.s32.f32 %v1391
        %v1456 = vcvt.s32.f32 %v1392
        %v1457 = vcvt.s32.f32 %v1393
        %v1458 = vcvt.s32.f32 %v1394
        %v1459 = vld [vmem:[%s2] sm:$0xff]
        %v1460 = vld [vmem:[%s2 + $0x8] sm:$0xff]
        %v1461 = vld [vmem:[%s2 + $0x10] sm:$0xff]
        %v1462 = vld [vmem:[%s2 + $0x18] sm:$0xff]
        %v1463 = vld [vmem:[%s2 + $0x20] sm:$0xff]
        %v1464 = vld [vmem:[%s2 + $0x28] sm:$0xff]
        %v1465 = vld [vmem:[%s2 + $0x30] sm:$0xff]
        %v1466 = vld [vmem:[%s2 + $0x38] sm:$0xff]
        %v1467 = vld [vmem:[%s2 + $0x40] sm:$0xff]
        %v1468 = vld [vmem:[%s2 + $0x48] sm:$0xff]
        %v1469 = vld [vmem:[%s2 + $0x50] sm:$0xff]
        %v1470 = vld [vmem:[%s2 + $0x58] sm:$0xff]
        %v1471 = vld [vmem:[%s2 + $0x60] sm:$0xff]
        %v1472 = vld [vmem:[%s2 + $0x68] sm:$0xff]
        %v1473 = vld [vmem:[%s2 + $0x70] sm:$0xff]
        %v1474 = vld [vmem:[%s2 + $0x78] sm:$0xff]
        %1475 = vmatpush.msra.mxu0 %v1425
        %1476 = vmatpush.msra.mxu0 %v1423
        %1477 = vmatpush.msra.mxu0 %v1421
        %1478 = vmatpush.msra.mxu0 %v1419
        %1479 = vmatpush.msra.mxu0 %v1417
        %1480 = vmatpush.msra.mxu0 %v1415
        %1481 = vmatpush.msra.mxu0 %v1413
        %1482 = vmatpush.msra.mxu0 %v1411
        %1483 = vmatpush.msra.mxu0 %v1409
        %1484 = vmatpush.msra.mxu0 %v1407
        %1485 = vmatpush.msra.mxu0 %v1405
        %1486 = vmatpush.msra.mxu0 %v1403
        %1487 = vmatpush.msra.mxu0 %v1401
        %1488 = vmatpush.msra.mxu0 %v1399
        %1489 = vmatpush.msra.mxu0 %v1397
        %1490 = vmatpush.msra.mxu0 %v1395
        %1491 = vmatmul.f32.gmra.mxu0 %v1459
        %v1492 = vpop.f32.mrf.mxu0
        %v1493 = vadd.f32 0.0, %v1492
        %1494 = vmatmul.f32.gmra.mxu0 %v1461
        %v1495 = vpop.f32.mrf.mxu0
        %v1496 = vadd.f32 0.0, %v1495
        %1497 = vmatmul.f32.gmra.mxu0 %v1463
        %v1498 = vpop.f32.mrf.mxu0
        %v1499 = vadd.f32 0.0, %v1498
        %1500 = vmatmul.f32.gmra.mxu0 %v1465
        %v1501 = vpop.f32.mrf.mxu0
        %v1502 = vadd.f32 0.0, %v1501
        %1503 = vmatmul.f32.gmra.mxu0 %v1467
        %v1504 = vpop.f32.mrf.mxu0
        %v1505 = vadd.f32 0.0, %v1504
        %1506 = vmatmul.f32.gmra.mxu0 %v1469
        %v1507 = vpop.f32.mrf.mxu0
        %v1508 = vadd.f32 0.0, %v1507
        %1509 = vmatmul.f32.gmra.mxu0 %v1471
        %v1510 = vpop.f32.mrf.mxu0
        %v1511 = vadd.f32 0.0, %v1510
        %1512 = vmatmul.f32.gmra.mxu0 %v1473
        %v1513 = vpop.f32.mrf.mxu0
        %v1514 = vadd.f32 0.0, %v1513
        %1515 = vdwg.mxu0
        %1516 = vmatpush.msra.mxu0 %v1457
        %1517 = vmatpush.msra.mxu0 %v1455
        %1518 = vmatpush.msra.mxu0 %v1453
        %1519 = vmatpush.msra.mxu0 %v1451
        %1520 = vmatpush.msra.mxu0 %v1449
        %1521 = vmatpush.msra.mxu0 %v1447
        %1522 = vmatpush.msra.mxu0 %v1445
        %1523 = vmatpush.msra.mxu0 %v1443
        %1524 = vmatpush.msra.mxu0 %v1441
        %1525 = vmatpush.msra.mxu0 %v1439
        %1526 = vmatpush.msra.mxu0 %v1437
        %1527 = vmatpush.msra.mxu0 %v1435
        %1528 = vmatpush.msra.mxu0 %v1433
        %1529 = vmatpush.msra.mxu0 %v1431
        %1530 = vmatpush.msra.mxu0 %v1429
        %1531 = vmatpush.msra.mxu0 %v1427
        %1532 = vmatmul.f32.gmra.mxu0 %v1460
        %v1533 = vpop.f32.mrf.mxu0
        %v1534 = vadd.f32 %v1493, %v1533
        %1535 = vmatmul.f32.gmra.mxu0 %v1462
        %v1536 = vpop.f32.mrf.mxu0
        %v1537 = vadd.f32 %v1496, %v1536
        %1538 = vmatmul.f32.gmra.mxu0 %v1464
        %v1539 = vpop.f32.mrf.mxu0
        %v1540 = vadd.f32 %v1499, %v1539
        %1541 = vmatmul.f32.gmra.mxu0 %v1466
        %v1542 = vpop.f32.mrf.mxu0
        %v1543 = vadd.f32 %v1502, %v1542
        %1544 = vmatmul.f32.gmra.mxu0 %v1468
        %v1545 = vpop.f32.mrf.mxu0
        %v1546 = vadd.f32 %v1505, %v1545
        %1547 = vmatmul.f32.gmra.mxu0 %v1470
        %v1548 = vpop.f32.mrf.mxu0
        %v1549 = vadd.f32 %v1508, %v1548
        %1550 = vmatmul.f32.gmra.mxu0 %v1472
        %v1551 = vpop.f32.mrf.mxu0
        %v1552 = vadd.f32 %v1511, %v1551
        %1553 = vmatmul.f32.gmra.mxu0 %v1474
        %v1554 = vpop.f32.mrf.mxu0
        %v1555 = vadd.f32 %v1514, %v1554
        %1556 = vdwg.mxu0
        %1557 = vmatpush.msra.mxu0 %v1426
        %1558 = vmatpush.msra.mxu0 %v1424
        %1559 = vmatpush.msra.mxu0 %v1422
        %1560 = vmatpush.msra.mxu0 %v1420
        %1561 = vmatpush.msra.mxu0 %v1418
        %1562 = vmatpush.msra.mxu0 %v1416
        %1563 = vmatpush.msra.mxu0 %v1414
        %1564 = vmatpush.msra.mxu0 %v1412
        %1565 = vmatpush.msra.mxu0 %v1410
        %1566 = vmatpush.msra.mxu0 %v1408
        %1567 = vmatpush.msra.mxu0 %v1406
        %1568 = vmatpush.msra.mxu0 %v1404
        %1569 = vmatpush.msra.mxu0 %v1402
        %1570 = vmatpush.msra.mxu0 %v1400
        %1571 = vmatpush.msra.mxu0 %v1398
        %1572 = vmatpush.msra.mxu0 %v1396
        %1573 = vmatmul.f32.gmra.mxu0 %v1459
        %v1574 = vpop.f32.mrf.mxu0
        %v1575 = vadd.f32 0.0, %v1574
        %1576 = vmatmul.f32.gmra.mxu0 %v1461
        %v1577 = vpop.f32.mrf.mxu0
        %v1578 = vadd.f32 0.0, %v1577
        %1579 = vmatmul.f32.gmra.mxu0 %v1463
        %v1580 = vpop.f32.mrf.mxu0
        %v1581 = vadd.f32 0.0, %v1580
        %1582 = vmatmul.f32.gmra.mxu0 %v1465
        %v1583 = vpop.f32.mrf.mxu0
        %v1584 = vadd.f32 0.0, %v1583
        %1585 = vmatmul.f32.gmra.mxu0 %v1467
        %v1586 = vpop.f32.mrf.mxu0
        %v1587 = vadd.f32 0.0, %v1586
        %1588 = vmatmul.f32.gmra.mxu0 %v1469
        %v1589 = vpop.f32.mrf.mxu0
        %v1590 = vadd.f32 0.0, %v1589
        %1591 = vmatmul.f32.gmra.mxu0 %v1471
        %v1592 = vpop.f32.mrf.mxu0
        %v1593 = vadd.f32 0.0, %v1592
        %1594 = vmatmul.f32.gmra.mxu0 %v1473
        %v1595 = vpop.f32.mrf.mxu0
        %v1596 = vadd.f32 0.0, %v1595
        %1597 = vdwg.mxu0
        %1598 = vmatpush.msra.mxu0 %v1458
        %1599 = vmatpush.msra.mxu0 %v1456
        %1600 = vmatpush.msra.mxu0 %v1454
        %1601 = vmatpush.msra.mxu0 %v1452
        %1602 = vmatpush.msra.mxu0 %v1450
        %1603 = vmatpush.msra.mxu0 %v1448
        %1604 = vmatpush.msra.mxu0 %v1446
        %1605 = vmatpush.msra.mxu0 %v1444
        %1606 = vmatpush.msra.mxu0 %v1442
        %1607 = vmatpush.msra.mxu0 %v1440
        %1608 = vmatpush.msra.mxu0 %v1438
        %1609 = vmatpush.msra.mxu0 %v1436
        %1610 = vmatpush.msra.mxu0 %v1434
        %1611 = vmatpush.msra.mxu0 %v1432
        %1612 = vmatpush.msra.mxu0 %v1430
        %1613 = vmatpush.msra.mxu0 %v1428
        %1614 = vmatmul.f32.gmra.mxu0 %v1460
        %v1615 = vpop.f32.mrf.mxu0
        %v1616 = vadd.f32 %v1575, %v1615
        %1617 = vmatmul.f32.gmra.mxu0 %v1462
        %v1618 = vpop.f32.mrf.mxu0
        %v1619 = vadd.f32 %v1578, %v1618
        %1620 = vmatmul.f32.gmra.mxu0 %v1464
        %v1621 = vpop.f32.mrf.mxu0
        %v1622 = vadd.f32 %v1581, %v1621
        %1623 = vmatmul.f32.gmra.mxu0 %v1466
        %v1624 = vpop.f32.mrf.mxu0
        %v1625 = vadd.f32 %v1584, %v1624
        %1626 = vmatmul.f32.gmra.mxu0 %v1468
        %v1627 = vpop.f32.mrf.mxu0
        %v1628 = vadd.f32 %v1587, %v1627
        %1629 = vmatmul.f32.gmra.mxu0 %v1470
        %v1630 = vpop.f32.mrf.mxu0
        %v1631 = vadd.f32 %v1590, %v1630
        %1632 = vmatmul.f32.gmra.mxu0 %v1472
        %v1633 = vpop.f32.mrf.mxu0
        %v1634 = vadd.f32 %v1593, %v1633
        %1635 = vmatmul.f32.gmra.mxu0 %v1474
        %v1636 = vpop.f32.mrf.mxu0
        %v1637 = vadd.f32 %v1596, %v1636
        %1638 = vdwg.mxu0
        %1639 = vst [vmem:[%s261] sm:$0xff] %v1534
        %1640 = vst [vmem:[%s261 + $0x8] sm:$0xff] %v1616
        %1641 = vst [vmem:[%s261 + $0x10] sm:$0xff] %v1537
        %1642 = vst [vmem:[%s261 + $0x18] sm:$0xff] %v1619
        %1643 = vst [vmem:[%s261 + $0x20] sm:$0xff] %v1540
        %1644 = vst [vmem:[%s261 + $0x28] sm:$0xff] %v1622
        %1645 = vst [vmem:[%s261 + $0x30] sm:$0xff] %v1543
        %1646 = vst [vmem:[%s261 + $0x38] sm:$0xff] %v1625
        %1647 = vst [vmem:[%s261 + $0x40] sm:$0xff] %v1546
        %1648 = vst [vmem:[%s261 + $0x48] sm:$0xff] %v1628
        %1649 = vst [vmem:[%s261 + $0x50] sm:$0xff] %v1549
        %1650 = vst [vmem:[%s261 + $0x58] sm:$0xff] %v1631
        %1651 = vst [vmem:[%s261 + $0x60] sm:$0xff] %v1552
        %1652 = vst [vmem:[%s261 + $0x68] sm:$0xff] %v1634
        %1653 = vst [vmem:[%s261 + $0x70] sm:$0xff] %v1555
        %1654 = vst [vmem:[%s261 + $0x78] sm:$0xff] %v1637
        %v1655 = vsub.f32 %v1534, %v263
        %v1656 = vsub.f32 %v1616, %v264
        %v1657 = vsub.f32 %v1537, %v265
        %v1658 = vsub.f32 %v1619, %v266
        %v1659 = vsub.f32 %v1540, %v267
        %v1660 = vsub.f32 %v1622, %v268
        %v1661 = vsub.f32 %v1543, %v269
        %v1662 = vsub.f32 %v1625, %v270
        %v1663 = vsub.f32 %v1546, %v271
        %v1664 = vsub.f32 %v1628, %v272
        %v1665 = vsub.f32 %v1549, %v273
        %v1666 = vsub.f32 %v1631, %v274
        %v1667 = vsub.f32 %v1552, %v275
        %v1668 = vsub.f32 %v1634, %v276
        %v1669 = vsub.f32 %v1555, %v277
        %v1670 = vsub.f32 %v1637, %v278
        %p1671 = scmp.eq.s32.totalorder %s22, 0
        %p1672 = scmp.eq.s32.totalorder %s23, 0
        %p1673 = pnand %p1671, %p1672
        %p1674 = pneg %p1673
        // Predicated region
        $region37: #{vector_quantizer_forward.1} parent=35 // pred_check
          _
        $region38: #{vector_quantizer_forward.1} parent=35 // pred_check_branch
          %1676 = sbr.rel (%p1673) target = $region40
        $region39: #{vector_quantizer_forward.1} parent=35 // pred_region
          %vm1677 = vcmask 0
          %1678 = vst.msk [vmem:[#allocation2] sm:$0x1] %vm1677, 0.0
        $region40: #{vector_quantizer_forward.1} parent=35 // pred_fallthru
          _
        %v1679 = vld [vmem:[#allocation2] sm:$0x1]
        %v1680 = vmul.f32 %v1655, %v1655
        %v1681 = vmul.f32 %v1656, %v1656
        %v1682 = vmul.f32 %v1657, %v1657
        %v1683 = vmul.f32 %v1658, %v1658
        %v1684 = vmul.f32 %v1659, %v1659
        %v1685 = vmul.f32 %v1660, %v1660
        %v1686 = vmul.f32 %v1661, %v1661
        %v1687 = vmul.f32 %v1662, %v1662
        %v1688 = vmul.f32 %v1663, %v1663
        %v1689 = vmul.f32 %v1664, %v1664
        %v1690 = vmul.f32 %v1665, %v1665
        %v1691 = vmul.f32 %v1666, %v1666
        %v1692 = vmul.f32 %v1667, %v1667
        %v1693 = vmul.f32 %v1668, %v1668
        %v1694 = vmul.f32 %v1669, %v1669
        %v1695 = vmul.f32 %v1670, %v1670
        %v1696 = vadd.f32 %v1680, %v1681
        %v1697 = vadd.f32 %v1696, %v1682
        %v1698 = vadd.f32 %v1697, %v1683
        %v1699 = vadd.f32 %v1698, %v1684
        %v1700 = vadd.f32 %v1699, %v1685
        %v1701 = vadd.f32 %v1700, %v1686
        %v1702 = vadd.f32 %v1701, %v1687
        %v1703 = vadd.f32 %v1702, %v1688
        %v1704 = vadd.f32 %v1703, %v1689
        %v1705 = vadd.f32 %v1704, %v1690
        %v1706 = vadd.f32 %v1705, %v1691
        %v1707 = vadd.f32 %v1706, %v1692
        %v1708 = vadd.f32 %v1707, %v1693
        %v1709 = vadd.f32 %v1708, %v1694
        %v1710 = vadd.f32 %v1709, %v1695
        %1711 = vadd.xlane.f32.xlu0 %v1710
        %v1712 = vpop.xlane.xlu0 %1711
        %v1713 = vrot.slane %v1712, 4
        %v1714 = vadd.f32 %v1712, %v1713
        %v1715 = vrot.slane %v1714, 2
        %v1716 = vadd.f32 %v1714, %v1715
        %v1717 = vrot.slane %v1716, 1
        %v1718 = vadd.f32 %v1716, %v1717
        %s1719 = vtos %v1718
        %v1720 = vstv %s1719
        %v1721 = vadd.f32 %v1679, %v1720
        %vm1722 = vcmask 0
        %1723 = vst.msk [vmem:[#allocation2] sm:$0x1] %vm1722, %v1721
        %s1724 = smul.u32 2, %s23
        %p1725 = scmp.lt.s32.totalorder %s22, 1
        %s1726 = scalar_select %p1725, %s22, 1
        %p1727 = scmp.lt.s32.totalorder %s1724, 1
        %s1728 = scalar_select %p1727, %s1724, 1
        %s1729 = smul.addr %s1726, 16
        %s1730 = sadd.s32 %s1728, %s1729
        %s1731 = smul.addr %s1730, 8
        %s1732 = scalar_lea.vmem %s4, %s1731
        // Predicated region
        $region41: #{vector_quantizer_forward.1} parent=35 // pred_check
          %p1733 = pneg %p141
        $region42: #{vector_quantizer_forward.1} parent=35 // pred_check_branch
          %1735 = sbr.rel (%p1733) target = $region44
        $region43: #{vector_quantizer_forward.1} parent=35 // pred_region
          %s1736 = smul.u32 2, %s23
        $region44: #{vector_quantizer_forward.1} parent=35 // pred_fallthru
          _
        // Predicated region
        $region45: #{vector_quantizer_forward.1} parent=35 // pred_check
          %p1737 = pneg %p162
        $region46: #{vector_quantizer_forward.1} parent=35 // pred_check_branch
          %1739 = sbr.rel (%p1737) target = $region48
        $region47: #{vector_quantizer_forward.1} parent=35 // pred_region
          %1741 = vsyncadd [#allocation3], 0
          %s1743 = sshll.u32 [#allocation2], 4
          %s1744 = int_to_ptr.vmem [resolvable:$true] %s1743
          %s1745 = sshll.u32 %s5, 4
          %s1746 = int_to_ptr.hbm [resolvable:$true] %s1745
          %1748 = dma.vmem_to_hbm [thread:$0]  %s1744, 16, %s1746, [#allocation3]
        $region48: #{vector_quantizer_forward.1} parent=35 // pred_fallthru
          _
        // Predicated region
        $region49: #{vector_quantizer_forward.1} parent=35 // pred_check
          %p1749 = pneg %p162
        $region50: #{vector_quantizer_forward.1} parent=35 // pred_check_branch
          %1751 = sbr.rel (%p1749) target = $region52
        $region51: #{vector_quantizer_forward.1} parent=35 // pred_region
          %1753 = dma.done [#allocation3], 16
        $region52: #{vector_quantizer_forward.1} parent=35 // pred_fallthru
          _
      $region36: #{vector_quantizer_forward.1} parent=5 // pred_fallthru
        _
      %p1754 = scmp.le.s32.totalorder 2, %s13
      // Predicated region
      $region53: #{vector_quantizer_forward.1} parent=5 // pred_check
        %p1755 = pneg %p1754
      $region54: #{vector_quantizer_forward.1} parent=5 // pred_check_branch
        %1757 = sbr.rel (%p1755) target = $region56
      $region55: #{vector_quantizer_forward.1} parent=5 // pred_region
        %s1758 = ssub.s32 %s13, 2
        // Predicated region
        $region57: #{vector_quantizer_forward.1} parent=55 // pred_check
          %p1759 = pneg %p147
        $region58: #{vector_quantizer_forward.1} parent=55 // pred_check_branch
          %1761 = sbr.rel (%p1759) target = $region60
        $region59: #{vector_quantizer_forward.1} parent=55 // pred_region
          %s1762 = smul.u32 2, %s25
          %p1763 = scmp.lt.s32.totalorder %s24, 1
          %s1764 = scalar_select %p1763, %s24, 1
          %p1765 = scmp.lt.s32.totalorder %s1762, 1
          %s1766 = scalar_select %p1765, %s1762, 1
          %s1767 = smul.addr %s1764, 16
          %s1768 = sadd.s32 %s1766, %s1767
          %s1769 = smul.addr %s1768, 8
          %s1770 = scalar_lea.vmem %s4, %s1769
        $region60: #{vector_quantizer_forward.1} parent=55 // pred_fallthru
          _
      $region56: #{vector_quantizer_forward.1} parent=5 // pred_fallthru
        _
    $region6: #{vector_quantizer_forward.1} parent=1 // loop_footer
      %s17 = sadd.s32 1, %s13
    $region7: #{vector_quantizer_forward.1} parent=1 // loop_footer_branch
      %12 = sbr.rel target = $region3
    $region8: #{vector_quantizer_forward.1} parent=1 // loop_exit
      _
    %1771 = vsyncpa [#allocation3], 1
    %s1772 = scalar_lea.sflag [#allocation3], 1
    %1773 = vsyncpa %s1772, 1

</llo_original>
